<compile_context>
chip_gen: v7x
topology: tpu7x:2x2x1
jax: 0.10.0
libtpu: 0.0.40
codegen_flags: <defaults>
</compile_context>

<pallas_src>
import jax
import jax.numpy as jnp
from jax.experimental import pallas as pl
from jax.experimental.pallas import tpu as pltpu

CLAMP_MIN = 0.8
CLAMP_MAX = 1.9

C_IN = 255
KSIZE = 64
K_TOTAL = C_IN * KSIZE * KSIZE          # 1,044,480
LANES = 128
K_ROWS = K_TOTAL // LANES               # 8,160 rows of 128 lanes
KB = 2                                  # K-chunks per batch (4 total steps for B=2)
TR = K_ROWS // KB                       # 4,080 rows per step (multiple of 8)


def conv_clamp_kernel(x_ref, w_ref, b_ref, o_ref, acc_ref):
    # grid = (batch, k-chunk); batch is "parallel", k is the reduction axis.
    k = pl.program_id(1)

    @pl.when(k == 0)
    def _():
        acc_ref[...] = jnp.zeros_like(acc_ref)

    # Lane-dense VPU multiply-accumulate; keep the 128-lane axis in the
    # accumulator, no MXU (N=1 would waste >99% of it) and no transpose.
    row0 = pl.multiple_of(k * TR, 8)
    x = x_ref[0]                               # (TR, 128)
    w = w_ref[pl.ds(row0, TR), :]              # (TR, 128) slice of resident weight
    acc_ref[...] += jnp.sum(x * w, axis=0, keepdims=True)   # (1, 128)

    @pl.when(k == pl.num_programs(1) - 1)
    def _():
        total = jnp.sum(acc_ref[...])           # single 128-lane reduce at the end
        v = total + b_ref[0, 0]
        v = jnp.maximum(v, CLAMP_MIN)           # clamp_min
        v = jnp.minimum(v, CLAMP_MAX)           # clamp_max
        o_ref[...] = jnp.broadcast_to(v, o_ref.shape).astype(o_ref.dtype)


def conv_clamp(x_nchw, weight, bias):
    """x_nchw: (B, 255, 64, 64) f32; weight: (1, 255, 64, 64) f32; bias: (1,) f32."""
    B = x_nchw.shape[0]
    x_r = x_nchw.reshape(B, K_ROWS, LANES)      # lane/sublane-dense view of x
    w_r = weight.reshape(K_ROWS, LANES)         # lane/sublane-dense view of W
    b_2d = bias.reshape(1, 1)

    out = pl.pallas_call(
        conv_clamp_kernel,
        out_shape=jax.ShapeDtypeStruct((B, 8, LANES), jnp.float32),
        grid_spec=pltpu.PrefetchScalarGridSpec(
            num_scalar_prefetch=0,
            grid=(B, KB),
            in_specs=[
                pl.BlockSpec((1, TR, LANES), lambda b, k: (b, k, 0)),
                # Full weight, constant block index -> DMA'd once, stays resident.
                pl.BlockSpec((K_ROWS, LANES), lambda b, k: (0, 0)),
                pl.BlockSpec((1, 1), lambda b, k: (0, 0),
                             memory_space=pltpu.MemorySpace.SMEM),
            ],
            out_specs=pl.BlockSpec((1, 8, LANES), lambda b, k: (b, 0, 0)),
            scratch_shapes=[pltpu.VMEM((1, LANES), jnp.float32)],
        ),
        compiler_params=pltpu.CompilerParams(
            dimension_semantics=("parallel", "arbitrary"),
            vmem_limit_bytes=32 * 1024 * 1024,
        ),
        cost_estimate=pl.CostEstimate(
            flops=2 * B * K_TOTAL,
            transcendentals=0,
            bytes_accessed=(B + 1) * K_TOTAL * 4 + B * 8 * LANES * 4,
        ),
    )(x_r, w_r, b_2d)

    # broadcasted (B, 8, 128) result -> conv output shape (B, 1, 1, 1)
    return out[:, 0, 0].reshape(B, 1, 1, 1)


if __name__ == "__main__":
    key = jax.random.PRNGKey(0)
    kx, kw, kb = jax.random.split(key, 3)

    B = 2
    # input consistent with the forward pass (needs C=255, H=W>=64 for the 64x64 kernel)
    x = jax.random.normal(kx, (B, C_IN, KSIZE, KSIZE), dtype=jnp.float32)

    # deterministic synthetic conv params (Conv2d(255, 1, 64) shapes)
    fan_in = C_IN * KSIZE * KSIZE
    w = jax.random.normal(kw, (1, C_IN, KSIZE, KSIZE), dtype=jnp.float32) / jnp.sqrt(
        jnp.float32(fan_in)
    )
    b = jax.random.normal(kb, (1,), dtype=jnp.float32) * 0.1

    out = conv_clamp(x, w, b)
    jax.block_until_ready(out)

    # pure-JAX reference: full-extent conv == per-batch dot product, then clamp
    pre = jnp.dot(x.reshape(B, -1), w.reshape(1, -1).T,
                  precision=jax.lax.Precision.HIGHEST) + b
    ref = jnp.clip(pre, CLAMP_MIN, CLAMP_MAX).reshape(B, 1, 1, 1)

    assert out.shape == (B, 1, 1, 1)
    assert jnp.allclose(out, ref, atol=1e-3, rtol=1e-3), (out, ref)

    print("KERNEL_OK")
</pallas_src>

<mosaic_0001>
module attributes {stable_mosaic.version = 11 : i64} {
  func.func @conv_clamp_kernel(%arg0: i32, %arg1: i32, %arg2: memref<1x4080x128xf32, #tpu.memory_space<vmem>>, %arg3: memref<8160x128xf32, #tpu.memory_space<vmem>>, %arg4: memref<1x1xf32, #tpu.memory_space<smem>>, %arg5: memref<1x8x128xf32, #tpu.memory_space<vmem>>, %arg6: memref<1x128xf32, #tpu.memory_space<vmem>>) attributes {dimension_semantics = [#tpu.dimension_semantics<parallel>, #tpu.dimension_semantics<arbitrary>], iteration_bounds = array<i64: 2, 2>, scalar_prefetch = 0 : i64, scratch_operands = 1 : i64, tpu.core_type = #tpu.core_type<tc>, window_params = [{transform_indices = @transform_0, window_bounds = array<i64: 1, 4080, 128>}, {pipeline_mode = #tpu.pipeline_mode<synchronous>, transform_indices = @transform_1, window_bounds = array<i64: 8160, 128>}, {transform_indices = @transform_2, window_bounds = array<i64: 1, 1>}, {transform_indices = @transform_3, window_bounds = array<i64: 1, 8, 128>}]} {
    %c0_i32 = arith.constant 0 : i32
    %0 = arith.cmpi eq, %arg1, %c0_i32 : i32
    %1 = arith.extui %0 : i1 to i32
    %c0_i32_0 = arith.constant 0 : i32
    %2 = arith.cmpi ne, %1, %c0_i32_0 : i32
    scf.if %2 {
      %cst_9 = arith.constant 0.000000e+00 : f32
      %18 = vector.broadcast %cst_9 : f32 to vector<1x128xf32>
      %c0_10 = arith.constant 0 : index
      %c0_11 = arith.constant 0 : index
      %19 = vector.load %arg6[%c0_10, %c0_11] : memref<1x128xf32, #tpu.memory_space<vmem>>, vector<1x128xf32>
      tpu.vector_store %arg6[%c0_10, %c0_11], %18 {strides = array<i32>} : memref<1x128xf32, #tpu.memory_space<vmem>>, vector<1x128xf32>,
    } else {
    }
    %c4080_i32 = arith.constant 4080 : i32
    %3 = arith.muli %arg1, %c4080_i32 : i32
    %4 = tpu.assume_multiple %3, 8 : i32
    %c0 = arith.constant 0 : index
    %c0_1 = arith.constant 0 : index
    %c0_2 = arith.constant 0 : index
    %5 = vector.load %arg2[%c0, %c0_1, %c0_2] : memref<1x4080x128xf32, #tpu.memory_space<vmem>>, vector<1x4080x128xf32>
    %6 = vector.shape_cast %5 : vector<1x4080x128xf32> to vector<4080x128xf32>
    %7 = arith.index_cast %4 : i32 to index
    %c0_3 = arith.constant 0 : index
    %8 = vector.load %arg3[%7, %c0_3] : memref<8160x128xf32, #tpu.memory_space<vmem>>, vector<4080x128xf32>
    %c0_4 = arith.constant 0 : index
    %c0_5 = arith.constant 0 : index
    %9 = vector.load %arg6[%c0_4, %c0_5] : memref<1x128xf32, #tpu.memory_space<vmem>>, vector<1x128xf32>
    %10 = arith.mulf %6, %8 : vector<4080x128xf32>
    %cst = arith.constant dense<0.000000e+00> : vector<128xf32>
    %11 = vector.multi_reduction <add>, %10, %cst [0] : vector<4080x128xf32> to vector<128xf32>
    %12 = vector.shape_cast %11 : vector<128xf32> to vector<1x128xf32>
    %13 = arith.addf %9, %12 : vector<1x128xf32>
    %c0_6 = arith.constant 0 : index
    %c0_7 = arith.constant 0 : index
    %14 = vector.load %arg6[%c0_6, %c0_7] : memref<1x128xf32, #tpu.memory_space<vmem>>, vector<1x128xf32>
    tpu.vector_store %arg6[%c0_6, %c0_7], %13 {strides = array<i32>} : memref<1x128xf32, #tpu.memory_space<vmem>>, vector<1x128xf32>,
    %c1_i32 = arith.constant 1 : i32
    %15 = arith.cmpi eq, %arg1, %c1_i32 : i32
    %16 = arith.extui %15 : i1 to i32
    %c0_i32_8 = arith.constant 0 : i32
    %17 = arith.cmpi ne, %16, %c0_i32_8 : i32
    scf.if %17 {
      %c0_9 = arith.constant 0 : index
      %c0_10 = arith.constant 0 : index
      %18 = vector.load %arg6[%c0_9, %c0_10] : memref<1x128xf32, #tpu.memory_space<vmem>>, vector<1x128xf32>
      %19 = vector.shape_cast %18 : vector<1x128xf32> to vector<1x1x128xf32>
      %cst_11 = arith.constant dense<0.000000e+00> : vector<1xf32>
      %20 = vector.multi_reduction <add>, %19, %cst_11 [1, 2] : vector<1x1x128xf32> to vector<1xf32>
      %21 = vector.shape_cast %20 : vector<1xf32> to vector<1x1x1xf32>
      %22 = vector.extract %21[0, 0, 0] : f32 from vector<1x1x1xf32>
      %c0_12 = arith.constant 0 : index
      %c0_13 = arith.constant 0 : index
      %23 = memref.load %arg4[%c0_12, %c0_13] : memref<1x1xf32, #tpu.memory_space<smem>>
      %24 = arith.addf %22, %23 : f32
      %cst_14 = arith.constant 8.000000e-01 : f32
      %25 = arith.maximumf %24, %cst_14 : f32
      %cst_15 = arith.constant 1.900000e+00 : f32
      %26 = arith.minimumf %25, %cst_15 : f32
      %27 = vector.broadcast %26 : f32 to vector<1x8x128xf32>
      %c0_16 = arith.constant 0 : index
      %c0_17 = arith.constant 0 : index
      %c0_18 = arith.constant 0 : index
      %28 = vector.load %arg5[%c0_16, %c0_17, %c0_18] : memref<1x8x128xf32, #tpu.memory_space<vmem>>, vector<1x8x128xf32>
      tpu.vector_store %arg5[%c0_16, %c0_17, %c0_18], %27 {strides = array<i32>} : memref<1x8x128xf32, #tpu.memory_space<vmem>>, vector<1x8x128xf32>,
    } else {
    }
    return
  }
  func.func @transform_0(%arg0: i32, %arg1: i32) -> (i32, i32, i32) {
    %c0_i32 = arith.constant 0 : i32
    %c0_i32_0 = arith.constant 0 : i32
    return %arg0, %arg1, %c0_i32 : i32, i32, i32
  }
  func.func @transform_1(%arg0: i32, %arg1: i32) -> (i32, i32) {
    %c0_i32 = arith.constant 0 : i32
    %c0_i32_0 = arith.constant 0 : i32
    %c0_i32_1 = arith.constant 0 : i32
    return %c0_i32, %c0_i32_0 : i32, i32
  }
  func.func @transform_2(%arg0: i32, %arg1: i32) -> (i32, i32) {
    %c0_i32 = arith.constant 0 : i32
    %c0_i32_0 = arith.constant 0 : i32
    %c0_i32_1 = arith.constant 0 : i32
    return %c0_i32, %c0_i32_0 : i32, i32
  }
  func.func @transform_3(%arg0: i32, %arg1: i32) -> (i32, i32, i32) {
    %c0_i32 = arith.constant 0 : i32
    %c0_i32_0 = arith.constant 0 : i32
    %c0_i32_1 = arith.constant 0 : i32
    return %arg0, %c0_i32, %c0_i32_0 : i32, i32, i32
  }
}

</mosaic_0001>

<llo_original>
// kernel: tpu_custom_call.1
$region0: #{tpu_custom_call.1}
  #allocation0 [shape = 'u32[]', space=smem, size = 0x4, offset = 0x4, fixed_abs, tag = 'smem constant byte address 0x4 - core index']
  #allocation1 [shape = 'u32[144,128]{1,0:T(1,128)}', space=vmem, size = 0x12000, scoped, tag = 'internal scratch']
  #allocation2 [shape = 'f32[1,128]{1,0:T(1,128)}', space=vmem, size = 0x200, scoped, tag = 'scratch operand']
  #allocation3 [shape = 'f32[1,1]{1,0:T(1,128)S(6)}', space=smem, size = 0x200, scoped, tag = 'scoped memory for tpu_custom_call.1']
  %s0 = inlined_call_operand.hbm [shape: f32[2,8160,128], index: 0, kind: input, shape index: {}]
  %s1 = inlined_call_operand.hbm [shape: f32[8160,128], index: 1, kind: input, shape index: {}]
  %s2 = inlined_call_operand.<no memory space> [shape: f32[1,1], index: 2, kind: input, shape index: {}]
  %s3 = inlined_call_operand.hbm [shape: f32[2,8,128], index: 3, kind: output, shape index: {}]
  %s4 = sld [smem:[#allocation0]]
  $region61: #{tpu_custom_call.1} parent=0
    _
  %s6 = ssub.s32 1, %s4
  %s7 = scalar_select 0, %s6, %s4
  %8 = sst [smem:[#allocation3]] %s2
  $region1: #{tpu_custom_call.1} parent=0
    #allocation4 [shape = 'u8[4177920]{0}', space=vmem, size = 0x3fc000, scoped, tag = 'input window, operand 0']
    #allocation5 [shape = 's32[2]{0}', space=sflag, size = 0x8, scoped, tag = 'scoped memory for tpu_custom_call.1']
    #allocation6 [shape = 's32[2]{0}', space=sflag, size = 0x8, scoped, tag = 'scoped memory for tpu_custom_call.1']
    #allocation7 [shape = 'u8[4177920]{0}', space=vmem, size = 0x3fc000, scoped, tag = 'input window, operand 1, single buffered']
    #allocation8 [shape = 's32[1]{0}', space=sflag, size = 0x4, scoped, tag = 'scoped memory for tpu_custom_call.1']
    #allocation9 [shape = 'u8[8192]{0}', space=vmem, size = 0x2000, scoped, tag = 'output window, operand 0']
    %9 = vsyncpa [#allocation5], 0
    %s10 = scalar_lea.sflag [#allocation5], 1
    %11 = vsyncpa %s10, 0
    %12 = vsyncpa [#allocation8], 0
    %13 = vsyncpa [#allocation6], 0
    %s14 = scalar_lea.sflag [#allocation6], 1
    %15 = vsyncpa %s14, 0
    loop: start=0, step=1, limit=6
    $region2: #{tpu_custom_call.1} parent=1 // loop_pre_header
      _
    $region3: #{tpu_custom_call.1} parent=1 // loop_header
      %s17 = sphi 0, %s21
      %p18 = scmp.ge.s32.totalorder %s17, 6
      %s24 = sphi 0, %s36
      %s25 = sphi 0, %s32
      %s26 = sphi 0, %s24
      %s27 = sphi 0, %s25
      %s28 = sphi 0, %s26
      %s29 = sphi 0, %s27
      %s41 = sphi 0, %s43
      %s44 = sphi 0, %s41
      %s45 = sphi 0, %s44
      %s61 = sphi 0, %s45
      %s65 = sphi 0, %s65
      %s67 = sphi 0, %s65
      %s68 = sphi 0, %s67
      %s82 = sphi 0, %s68
      %s86 = sphi 0, %s86
      %s88 = sphi 0, %s86
      %s89 = sphi 0, %s88
      %s103 = sphi 0, %s89
      %s109 = sphi 0, %s111
      %s112 = sphi 0, %s109
      %s113 = sphi 0, %s112
      %s129 = sphi 0, %s113
    $region4: #{tpu_custom_call.1} parent=1 // loop_header_branch
      %20 = sbr.rel (%p18) target = $region8
    $region5: #{tpu_custom_call.1} parent=1 // loop_body
      %s22 = ssub.s32 %s17, 1
      %s23 = ssub.s32 %s17, 2
      %s30 = sadd.s32 1, %s25
      %p31 = scmp.ge.s32.totalorder %s30, 2
      %s32 = scalar_select %p31, 0, %s30
      %s33 = sadd.s32 1, %s24
      %s34 = scalar_select %p31, %s33, %s24
      %p35 = scmp.ge.s32.totalorder %s34, 2
      %s36 = scalar_select %p35, 0, %s34
      %s37 = ssub.s32 %s24, %s36
      %s38 = ssub.s32 %s25, %s32
      %s39 = sor.u32 %s37, %s38
      %p40 = scmp.eq.s32.totalorder %s39, 0
      %s42 = sadd.s32 %s41, 1
      %s43 = scalar_select %p40, %s41, %s42
      %p46 = pneg %p40
      %p47 = scmp.eq.s32.totalorder %s17, 3
      %p48 = por %p46, %p47
      %p49 = scmp.ne.s32.totalorder %s41, %s44
      %p50 = scmp.eq.s32.totalorder %s17, 0
      %p51 = por %p49, %p50
      %p52 = scmp.ne.s32.totalorder %s41, %s44
      %p53 = scmp.eq.s32.totalorder %s22, 3
      %p54 = por %p52, %p53
      %p55 = scmp.ne.s32.totalorder %s44, %s45
      %p56 = scmp.eq.s32.totalorder %s22, 0
      %p57 = por %p55, %p56
      %p58 = scmp.ne.s32.totalorder %s44, %s45
      %p59 = scmp.eq.s32.totalorder %s23, 3
      %p60 = por %p58, %p59
      %p62 = scmp.ne.s32.totalorder %s45, %s61
      %p63 = scmp.eq.s32.totalorder %s23, 0
      %p64 = por %p62, %p63
      %s66 = sadd.s32 %s65, 1
      %p69 = scmp.eq.s32.totalorder %s17, 3
      %p70 = scmp.ne.s32.totalorder %s65, %s67
      %p71 = scmp.eq.s32.totalorder %s17, 0
      %p72 = por %p70, %p71
      %p73 = scmp.ne.s32.totalorder %s65, %s67
      %p74 = scmp.eq.s32.totalorder %s22, 3
      %p75 = por %p73, %p74
      %p76 = scmp.ne.s32.totalorder %s67, %s68
      %p77 = scmp.eq.s32.totalorder %s22, 0
      %p78 = por %p76, %p77
      %p79 = scmp.ne.s32.totalorder %s67, %s68
      %p80 = scmp.eq.s32.totalorder %s23, 3
      %p81 = por %p79, %p80
      %p83 = scmp.ne.s32.totalorder %s68, %s82
      %p84 = scmp.eq.s32.totalorder %s23, 0
      %p85 = por %p83, %p84
      %s87 = sadd.s32 %s86, 1
      %p90 = scmp.eq.s32.totalorder %s17, 3
      %p91 = scmp.ne.s32.totalorder %s86, %s88
      %p92 = scmp.eq.s32.totalorder %s17, 0
      %p93 = por %p91, %p92
      %p94 = scmp.ne.s32.totalorder %s86, %s88
      %p95 = scmp.eq.s32.totalorder %s22, 3
      %p96 = por %p94, %p95
      %p97 = scmp.ne.s32.totalorder %s88, %s89
      %p98 = scmp.eq.s32.totalorder %s22, 0
      %p99 = por %p97, %p98
      %p100 = scmp.ne.s32.totalorder %s88, %s89
      %p101 = scmp.eq.s32.totalorder %s23, 3
      %p102 = por %p100, %p101
      %p104 = scmp.ne.s32.totalorder %s89, %s103
      %p105 = scmp.eq.s32.totalorder %s23, 0
      %p106 = por %p104, %p105
      %s107 = ssub.s32 %s24, %s36
      %p108 = scmp.eq.s32.totalorder %s107, 0
      %s110 = sadd.s32 %s109, 1
      %s111 = scalar_select %p108, %s109, %s110
      %p114 = pneg %p108
      %p115 = scmp.eq.s32.totalorder %s17, 3
      %p116 = por %p114, %p115
      %p117 = scmp.ne.s32.totalorder %s109, %s112
      %p118 = scmp.eq.s32.totalorder %s17, 0
      %p119 = por %p117, %p118
      %p120 = scmp.ne.s32.totalorder %s109, %s112
      %p121 = scmp.eq.s32.totalorder %s22, 3
      %p122 = por %p120, %p121
      %p123 = scmp.ne.s32.totalorder %s112, %s113
      %p124 = scmp.eq.s32.totalorder %s22, 0
      %p125 = por %p123, %p124
      %p126 = scmp.ne.s32.totalorder %s112, %s113
      %p127 = scmp.eq.s32.totalorder %s23, 3
      %p128 = por %p126, %p127
      %p130 = scmp.ne.s32.totalorder %s113, %s129
      %p131 = scmp.eq.s32.totalorder %s23, 0
      %p132 = por %p130, %p131
      %p133 = scmp.le.s32.totalorder 1, %s17
      %p134 = scmp.lt.s32.totalorder %s17, 5
      %p135 = pnand %p133, %p134
      %p136 = pneg %p135
      // Predicated region
      $region9: #{tpu_custom_call.1} parent=5 // pred_check
        _
      $region10: #{tpu_custom_call.1} parent=5 // pred_check_branch
        %138 = sbr.rel (%p135) target = $region12
      $region11: #{tpu_custom_call.1} parent=5 // pred_region
        %s139 = ssub.s32 %s17, 1
        // Predicated region
        $region13: #{tpu_custom_call.1} parent=11 // pred_check
          %p140 = pneg %p78
        $region14: #{tpu_custom_call.1} parent=11 // pred_check_branch
          %142 = sbr.rel (%p140) target = $region16
        $region15: #{tpu_custom_call.1} parent=11 // pred_region
          %s144 = ssub.s32 130560, 130560
          %145 = vsyncadd [#allocation8], %s144
          %s146 = sshll.u32 [#allocation7], 4
          %s147 = int_to_ptr.vmem [resolvable:$true] %s146
          %152 = dma.hbm_to_vmem [thread:$0]  %s1, 130560, %s147, [#allocation8], 128, 128, 8
        $region16: #{tpu_custom_call.1} parent=11 // pred_fallthru
          _
        // Predicated region
        $region17: #{tpu_custom_call.1} parent=11 // pred_check
          %p153 = pneg %p99
        $region18: #{tpu_custom_call.1} parent=11 // pred_check_branch
          %155 = sbr.rel (%p153) target = $region20
        $region19: #{tpu_custom_call.1} parent=11 // pred_region
          _
        $region20: #{tpu_custom_call.1} parent=11 // pred_fallthru
          _
      $region12: #{tpu_custom_call.1} parent=5 // pred_fallthru
        _
      %p156 = scmp.lt.s32.totalorder %s17, 4
      // Predicated region
      $region21: #{tpu_custom_call.1} parent=5 // pred_check
        %p157 = pneg %p156
      $region22: #{tpu_custom_call.1} parent=5 // pred_check_branch
        %159 = sbr.rel (%p157) target = $region24
      $region23: #{tpu_custom_call.1} parent=5 // pred_region
        // Predicated region
        $region25: #{tpu_custom_call.1} parent=23 // pred_check
          %p160 = pneg %p51
        $region26: #{tpu_custom_call.1} parent=23 // pred_check_branch
          %162 = sbr.rel (%p160) target = $region28
        $region27: #{tpu_custom_call.1} parent=23 // pred_region
          %s163 = sand.u32 %s41, 1
          %s164 = scalar_lea.sflag [#allocation5], %s163
          %s165 = sand.u32 %s41, 1
          %s166 = smul.addr %s165, 4080
          %s167 = scalar_lea.vmem [#allocation4], %s166
          %s168 = smul.u32 510, %s25
          %s170 = ssub.s32 65280, 65280
          %171 = vsyncadd %s164, %s170
          %s172 = smul.addr %s24, 1020
          %s173 = sadd.s32 %s168, %s172
          %s174 = smul.addr %s173, 128
          %s175 = scalar_lea.hbm %s0, %s174
          %s176 = sshll.u32 %s167, 4
          %s177 = int_to_ptr.vmem [resolvable:$true] %s176
          %182 = dma.hbm_to_vmem [thread:$0]  %s175, 65280, %s177, %s164, 128, 128, 8
        $region28: #{tpu_custom_call.1} parent=23 // pred_fallthru
          _
      $region24: #{tpu_custom_call.1} parent=5 // pred_fallthru
        _
      %p183 = scmp.le.s32.totalorder 1, %s17
      %p184 = scmp.lt.s32.totalorder %s17, 5
      %p185 = pnand %p183, %p184
      %p186 = pneg %p185
      // Predicated region
      $region29: #{tpu_custom_call.1} parent=5 // pred_check
        _
      $region30: #{tpu_custom_call.1} parent=5 // pred_check_branch
        %188 = sbr.rel (%p185) target = $region32
      $region31: #{tpu_custom_call.1} parent=5 // pred_region
        %s189 = ssub.s32 %s17, 1
        %s190 = sand.u32 %s44, 1
        %s191 = scalar_lea.sflag [#allocation5], %s190
        %s192 = sand.u32 %s44, 1
        %s193 = smul.addr %s192, 4080
        %s194 = scalar_lea.vmem [#allocation4], %s193
        // Predicated region
        $region33: #{tpu_custom_call.1} parent=31 // pred_check
          %p195 = pneg %p57
        $region34: #{tpu_custom_call.1} parent=31 // pred_check_branch
          %197 = sbr.rel (%p195) target = $region36
        $region35: #{tpu_custom_call.1} parent=31 // pred_region
          %198 = dma.done %s191, 65280
        $region36: #{tpu_custom_call.1} parent=31 // pred_fallthru
          _
        // Predicated region
        $region37: #{tpu_custom_call.1} parent=31 // pred_check
          %p199 = pneg %p78
        $region38: #{tpu_custom_call.1} parent=31 // pred_check_branch
          %201 = sbr.rel (%p199) target = $region40
        $region39: #{tpu_custom_call.1} parent=31 // pred_region
          %202 = dma.done [#allocation8], 130560
        $region40: #{tpu_custom_call.1} parent=31 // pred_fallthru
          _
        %s203 = sand.u32 %s44, 1
        %s204 = scalar_lea.sflag [#allocation5], %s203
        %s205 = sand.u32 %s44, 1
        %s206 = smul.addr %s205, 4080
        %s207 = scalar_lea.vmem [#allocation4], %s206
        %p208 = pneg %p57
        %p209 = pneg %p54
        %p210 = pneg %p78
        %p211 = pneg %p75
        %p212 = pneg %p99
        %p213 = pneg %p96
        %p214 = pneg %p125
        %p215 = pneg %p122
        %s216 = sand.u32 %s112, 1
        %s217 = scalar_lea.sflag [#allocation6], %s216
        %s218 = sand.u32 %s112, 1
        %s219 = smul.addr %s218, 8
        %s220 = scalar_lea.vmem [#allocation9], %s219
        %s221 = smul.u32 510, %s27
        %p222 = scmp.eq.s32.totalorder %s27, 0
        // Predicated region
        $region41: #{tpu_custom_call.1} parent=31 // pred_check
          %p223 = pneg %p222
        $region42: #{tpu_custom_call.1} parent=31 // pred_check_branch
          %225 = sbr.rel (%p223) target = $region44
        $region43: #{tpu_custom_call.1} parent=31 // pred_region
          %226 = vst [vmem:[#allocation2] sm:$0x1] 0.0
        $region44: #{tpu_custom_call.1} parent=31 // pred_fallthru
          _
        %s227 = smul.u32 %s27, 4080
        %v228 = vld [vmem:[%s194] sm:$0xff]
        %v229 = vld [vmem:[%s194 + $0x8] sm:$0xff]
        %v230 = vld [vmem:[%s194 + $0x10] sm:$0xff]
        %v231 = vld [vmem:[%s194 + $0x18] sm:$0xff]
        %v232 = vld [vmem:[%s194 + $0x20] sm:$0xff]
        %v233 = vld [vmem:[%s194 + $0x28] sm:$0xff]
        %v234 = vld [vmem:[%s194 + $0x30] sm:$0xff]
        %v235 = vld [vmem:[%s194 + $0x38] sm:$0xff]
        %v236 = vld [vmem:[%s194 + $0x40] sm:$0xff]
        %v237 = vld [vmem:[%s194 + $0x48] sm:$0xff]
        %v238 = vld [vmem:[%s194 + $0x50] sm:$0xff]
        %v239 = vld [vmem:[%s194 + $0x58] sm:$0xff]
        %v240 = vld [vmem:[%s194 + $0x60] sm:$0xff]
        %v241 = vld [vmem:[%s194 + $0x68] sm:$0xff]
        %v242 = vld [vmem:[%s194 + $0x70] sm:$0xff]
        %v243 = vld [vmem:[%s194 + $0x78] sm:$0xff]
        %v244 = vld [vmem:[%s194 + $0x80] sm:$0xff]
        %v245 = vld [vmem:[%s194 + $0x88] sm:$0xff]
        %v246 = vld [vmem:[%s194 + $0x90] sm:$0xff]
        %v247 = vld [vmem:[%s194 + $0x98] sm:$0xff]
        %v248 = vld [vmem:[%s194 + $0xa0] sm:$0xff]
        %v249 = vld [vmem:[%s194 + $0xa8] sm:$0xff]
        %v250 = vld [vmem:[%s194 + $0xb0] sm:$0xff]
        %v251 = vld [vmem:[%s194 + $0xb8] sm:$0xff]
        %v252 = vld [vmem:[%s194 + $0xc0] sm:$0xff]
        %v253 = vld [vmem:[%s194 + $0xc8] sm:$0xff]
        %v254 = vld [vmem:[%s194 + $0xd0] sm:$0xff]
        %v255 = vld [vmem:[%s194 + $0xd8] sm:$0xff]
        %v256 = vld [vmem:[%s194 + $0xe0] sm:$0xff]
        %v257 = vld [vmem:[%s194 + $0xe8] sm:$0xff]
        %v258 = vld [vmem:[%s194 + $0xf0] sm:$0xff]
        %v259 = vld [vmem:[%s194 + $0xf8] sm:$0xff]
        %v260 = vld [vmem:[%s194 + $0x100] sm:$0xff]
        %v261 = vld [vmem:[%s194 + $0x108] sm:$0xff]
        %v262 = vld [vmem:[%s194 + $0x110] sm:$0xff]
        %v263 = vld [vmem:[%s194 + $0x118] sm:$0xff]
        %v264 = vld [vmem:[%s194 + $0x120] sm:$0xff]
        %v265 = vld [vmem:[%s194 + $0x128] sm:$0xff]
        %v266 = vld [vmem:[%s194 + $0x130] sm:$0xff]
        %v267 = vld [vmem:[%s194 + $0x138] sm:$0xff]
        %v268 = vld [vmem:[%s194 + $0x140] sm:$0xff]
        %v269 = vld [vmem:[%s194 + $0x148] sm:$0xff]
        %v270 = vld [vmem:[%s194 + $0x150] sm:$0xff]
        %v271 = vld [vmem:[%s194 + $0x158] sm:$0xff]
        %v272 = vld [vmem:[%s194 + $0x160] sm:$0xff]
        %v273 = vld [vmem:[%s194 + $0x168] sm:$0xff]
        %v274 = vld [vmem:[%s194 + $0x170] sm:$0xff]
        %v275 = vld [vmem:[%s194 + $0x178] sm:$0xff]
        %v276 = vld [vmem:[%s194 + $0x180] sm:$0xff]
        %v277 = vld [vmem:[%s194 + $0x188] sm:$0xff]
        %v278 = vld [vmem:[%s194 + $0x190] sm:$0xff]
        %v279 = vld [vmem:[%s194 + $0x198] sm:$0xff]
        %v280 = vld [vmem:[%s194 + $0x1a0] sm:$0xff]
        %v281 = vld [vmem:[%s194 + $0x1a8] sm:$0xff]
        %v282 = vld [vmem:[%s194 + $0x1b0] sm:$0xff]
        %v283 = vld [vmem:[%s194 + $0x1b8] sm:$0xff]
        %v284 = vld [vmem:[%s194 + $0x1c0] sm:$0xff]
        %v285 = vld [vmem:[%s194 + $0x1c8] sm:$0xff]
        %v286 = vld [vmem:[%s194 + $0x1d0] sm:$0xff]
        %v287 = vld [vmem:[%s194 + $0x1d8] sm:$0xff]
        %v288 = vld [vmem:[%s194 + $0x1e0] sm:$0xff]
        %v289 = vld [vmem:[%s194 + $0x1e8] sm:$0xff]
        %v290 = vld [vmem:[%s194 + $0x1f0] sm:$0xff]
        %v291 = vld [vmem:[%s194 + $0x1f8] sm:$0xff]
        %v292 = vld [vmem:[%s194 + $0x200] sm:$0xff]
        %v293 = vld [vmem:[%s194 + $0x208] sm:$0xff]
        %v294 = vld [vmem:[%s194 + $0x210] sm:$0xff]
        %v295 = vld [vmem:[%s194 + $0x218] sm:$0xff]
        %v296 = vld [vmem:[%s194 + $0x220] sm:$0xff]
        %v297 = vld [vmem:[%s194 + $0x228] sm:$0xff]
        %v298 = vld [vmem:[%s194 + $0x230] sm:$0xff]
        %v299 = vld [vmem:[%s194 + $0x238] sm:$0xff]
        %v300 = vld [vmem:[%s194 + $0x240] sm:$0xff]
        %v301 = vld [vmem:[%s194 + $0x248] sm:$0xff]
        %v302 = vld [vmem:[%s194 + $0x250] sm:$0xff]
        %v303 = vld [vmem:[%s194 + $0x258] sm:$0xff]
        %v304 = vld [vmem:[%s194 + $0x260] sm:$0xff]
        %v305 = vld [vmem:[%s194 + $0x268] sm:$0xff]
        %v306 = vld [vmem:[%s194 + $0x270] sm:$0xff]
        %v307 = vld [vmem:[%s194 + $0x278] sm:$0xff]
        %v308 = vld [vmem:[%s194 + $0x280] sm:$0xff]
        %v309 = vld [vmem:[%s194 + $0x288] sm:$0xff]
        %v310 = vld [vmem:[%s194 + $0x290] sm:$0xff]
        %v311 = vld [vmem:[%s194 + $0x298] sm:$0xff]
        %v312 = vld [vmem:[%s194 + $0x2a0] sm:$0xff]
        %v313 = vld [vmem:[%s194 + $0x2a8] sm:$0xff]
        %v314 = vld [vmem:[%s194 + $0x2b0] sm:$0xff]
        %v315 = vld [vmem:[%s194 + $0x2b8] sm:$0xff]
        %v316 = vld [vmem:[%s194 + $0x2c0] sm:$0xff]
        %v317 = vld [vmem:[%s194 + $0x2c8] sm:$0xff]
        %v318 = vld [vmem:[%s194 + $0x2d0] sm:$0xff]
        %v319 = vld [vmem:[%s194 + $0x2d8] sm:$0xff]
        %v320 = vld [vmem:[%s194 + $0x2e0] sm:$0xff]
        %v321 = vld [vmem:[%s194 + $0x2e8] sm:$0xff]
        %v322 = vld [vmem:[%s194 + $0x2f0] sm:$0xff]
        %v323 = vld [vmem:[%s194 + $0x2f8] sm:$0xff]
        %v324 = vld [vmem:[%s194 + $0x300] sm:$0xff]
        %v325 = vld [vmem:[%s194 + $0x308] sm:$0xff]
        %v326 = vld [vmem:[%s194 + $0x310] sm:$0xff]
        %v327 = vld [vmem:[%s194 + $0x318] sm:$0xff]
        %v328 = vld [vmem:[%s194 + $0x320] sm:$0xff]
        %v329 = vld [vmem:[%s194 + $0x328] sm:$0xff]
        %v330 = vld [vmem:[%s194 + $0x330] sm:$0xff]
        %v331 = vld [vmem:[%s194 + $0x338] sm:$0xff]
        %v332 = vld [vmem:[%s194 + $0x340] sm:$0xff]
        %v333 = vld [vmem:[%s194 + $0x348] sm:$0xff]
        %v334 = vld [vmem:[%s194 + $0x350] sm:$0xff]
        %v335 = vld [vmem:[%s194 + $0x358] sm:$0xff]
        %v336 = vld [vmem:[%s194 + $0x360] sm:$0xff]
        %v337 = vld [vmem:[%s194 + $0x368] sm:$0xff]
        %v338 = vld [vmem:[%s194 + $0x370] sm:$0xff]
        %v339 = vld [vmem:[%s194 + $0x378] sm:$0xff]
        %v340 = vld [vmem:[%s194 + $0x380] sm:$0xff]
        %v341 = vld [vmem:[%s194 + $0x388] sm:$0xff]
        %v342 = vld [vmem:[%s194 + $0x390] sm:$0xff]
        %v343 = vld [vmem:[%s194 + $0x398] sm:$0xff]
        %v344 = vld [vmem:[%s194 + $0x3a0] sm:$0xff]
        %v345 = vld [vmem:[%s194 + $0x3a8] sm:$0xff]
        %v346 = vld [vmem:[%s194 + $0x3b0] sm:$0xff]
        %v347 = vld [vmem:[%s194 + $0x3b8] sm:$0xff]
        %v348 = vld [vmem:[%s194 + $0x3c0] sm:$0xff]
        %v349 = vld [vmem:[%s194 + $0x3c8] sm:$0xff]
        %v350 = vld [vmem:[%s194 + $0x3d0] sm:$0xff]
        %v351 = vld [vmem:[%s194 + $0x3d8] sm:$0xff]
        %v352 = vld [vmem:[%s194 + $0x3e0] sm:$0xff]
        %v353 = vld [vmem:[%s194 + $0x3e8] sm:$0xff]
        %v354 = vld [vmem:[%s194 + $0x3f0] sm:$0xff]
        %v355 = vld [vmem:[%s194 + $0x3f8] sm:$0xff]
        %v356 = vld [vmem:[%s194 + $0x400] sm:$0xff]
        %v357 = vld [vmem:[%s194 + $0x408] sm:$0xff]
        %v358 = vld [vmem:[%s194 + $0x410] sm:$0xff]
        %v359 = vld [vmem:[%s194 + $0x418] sm:$0xff]
        %v360 = vld [vmem:[%s194 + $0x420] sm:$0xff]
        %v361 = vld [vmem:[%s194 + $0x428] sm:$0xff]
        %v362 = vld [vmem:[%s194 + $0x430] sm:$0xff]
        %v363 = vld [vmem:[%s194 + $0x438] sm:$0xff]
        %v364 = vld [vmem:[%s194 + $0x440] sm:$0xff]
        %v365 = vld [vmem:[%s194 + $0x448] sm:$0xff]
        %v366 = vld [vmem:[%s194 + $0x450] sm:$0xff]
        %v367 = vld [vmem:[%s194 + $0x458] sm:$0xff]
        %v368 = vld [vmem:[%s194 + $0x460] sm:$0xff]
        %v369 = vld [vmem:[%s194 + $0x468] sm:$0xff]
        %v370 = vld [vmem:[%s194 + $0x470] sm:$0xff]
        %v371 = vld [vmem:[%s194 + $0x478] sm:$0xff]
        %v372 = vld [vmem:[%s194 + $0x480] sm:$0xff]
        %v373 = vld [vmem:[%s194 + $0x488] sm:$0xff]
        %v374 = vld [vmem:[%s194 + $0x490] sm:$0xff]
        %v375 = vld [vmem:[%s194 + $0x498] sm:$0xff]
        %v376 = vld [vmem:[%s194 + $0x4a0] sm:$0xff]
        %v377 = vld [vmem:[%s194 + $0x4a8] sm:$0xff]
        %v378 = vld [vmem:[%s194 + $0x4b0] sm:$0xff]
        %v379 = vld [vmem:[%s194 + $0x4b8] sm:$0xff]
        %v380 = vld [vmem:[%s194 + $0x4c0] sm:$0xff]
        %v381 = vld [vmem:[%s194 + $0x4c8] sm:$0xff]
        %v382 = vld [vmem:[%s194 + $0x4d0] sm:$0xff]
        %v383 = vld [vmem:[%s194 + $0x4d8] sm:$0xff]
        %v384 = vld [vmem:[%s194 + $0x4e0] sm:$0xff]
        %v385 = vld [vmem:[%s194 + $0x4e8] sm:$0xff]
        %v386 = vld [vmem:[%s194 + $0x4f0] sm:$0xff]
        %v387 = vld [vmem:[%s194 + $0x4f8] sm:$0xff]
        %v388 = vld [vmem:[%s194 + $0x500] sm:$0xff]
        %v389 = vld [vmem:[%s194 + $0x508] sm:$0xff]
        %v390 = vld [vmem:[%s194 + $0x510] sm:$0xff]
        %v391 = vld [vmem:[%s194 + $0x518] sm:$0xff]
        %v392 = vld [vmem:[%s194 + $0x520] sm:$0xff]
        %v393 = vld [vmem:[%s194 + $0x528] sm:$0xff]
        %v394 = vld [vmem:[%s194 + $0x530] sm:$0xff]
        %v395 = vld [vmem:[%s194 + $0x538] sm:$0xff]
        %v396 = vld [vmem:[%s194 + $0x540] sm:$0xff]
        %v397 = vld [vmem:[%s194 + $0x548] sm:$0xff]
        %v398 = vld [vmem:[%s194 + $0x550] sm:$0xff]
        %v399 = vld [vmem:[%s194 + $0x558] sm:$0xff]
        %v400 = vld [vmem:[%s194 + $0x560] sm:$0xff]
        %v401 = vld [vmem:[%s194 + $0x568] sm:$0xff]
        %v402 = vld [vmem:[%s194 + $0x570] sm:$0xff]
        %v403 = vld [vmem:[%s194 + $0x578] sm:$0xff]
        %v404 = vld [vmem:[%s194 + $0x580] sm:$0xff]
        %v405 = vld [vmem:[%s194 + $0x588] sm:$0xff]
        %v406 = vld [vmem:[%s194 + $0x590] sm:$0xff]
        %v407 = vld [vmem:[%s194 + $0x598] sm:$0xff]
        %v408 = vld [vmem:[%s194 + $0x5a0] sm:$0xff]
        %v409 = vld [vmem:[%s194 + $0x5a8] sm:$0xff]
        %v410 = vld [vmem:[%s194 + $0x5b0] sm:$0xff]
        %v411 = vld [vmem:[%s194 + $0x5b8] sm:$0xff]
        %v412 = vld [vmem:[%s194 + $0x5c0] sm:$0xff]
        %v413 = vld [vmem:[%s194 + $0x5c8] sm:$0xff]
        %v414 = vld [vmem:[%s194 + $0x5d0] sm:$0xff]
        %v415 = vld [vmem:[%s194 + $0x5d8] sm:$0xff]
        %v416 = vld [vmem:[%s194 + $0x5e0] sm:$0xff]
        %v417 = vld [vmem:[%s194 + $0x5e8] sm:$0xff]
        %v418 = vld [vmem:[%s194 + $0x5f0] sm:$0xff]
        %v419 = vld [vmem:[%s194 + $0x5f8] sm:$0xff]
        %v420 = vld [vmem:[%s194 + $0x600] sm:$0xff]
        %v421 = vld [vmem:[%s194 + $0x608] sm:$0xff]
        %v422 = vld [vmem:[%s194 + $0x610] sm:$0xff]
        %v423 = vld [vmem:[%s194 + $0x618] sm:$0xff]
        %v424 = vld [vmem:[%s194 + $0x620] sm:$0xff]
        %v425 = vld [vmem:[%s194 + $0x628] sm:$0xff]
        %v426 = vld [vmem:[%s194 + $0x630] sm:$0xff]
        %v427 = vld [vmem:[%s194 + $0x638] sm:$0xff]
        %v428 = vld [vmem:[%s194 + $0x640] sm:$0xff]
        %v429 = vld [vmem:[%s194 + $0x648] sm:$0xff]
        %v430 = vld [vmem:[%s194 + $0x650] sm:$0xff]
        %v431 = vld [vmem:[%s194 + $0x658] sm:$0xff]
        %v432 = vld [vmem:[%s194 + $0x660] sm:$0xff]
        %v433 = vld [vmem:[%s194 + $0x668] sm:$0xff]
        %v434 = vld [vmem:[%s194 + $0x670] sm:$0xff]
        %v435 = vld [vmem:[%s194 + $0x678] sm:$0xff]
        %v436 = vld [vmem:[%s194 + $0x680] sm:$0xff]
        %v437 = vld [vmem:[%s194 + $0x688] sm:$0xff]
        %v438 = vld [vmem:[%s194 + $0x690] sm:$0xff]
        %v439 = vld [vmem:[%s194 + $0x698] sm:$0xff]
        %v440 = vld [vmem:[%s194 + $0x6a0] sm:$0xff]
        %v441 = vld [vmem:[%s194 + $0x6a8] sm:$0xff]
        %v442 = vld [vmem:[%s194 + $0x6b0] sm:$0xff]
        %v443 = vld [vmem:[%s194 + $0x6b8] sm:$0xff]
        %v444 = vld [vmem:[%s194 + $0x6c0] sm:$0xff]
        %v445 = vld [vmem:[%s194 + $0x6c8] sm:$0xff]
        %v446 = vld [vmem:[%s194 + $0x6d0] sm:$0xff]
        %v447 = vld [vmem:[%s194 + $0x6d8] sm:$0xff]
        %v448 = vld [vmem:[%s194 + $0x6e0] sm:$0xff]
        %v449 = vld [vmem:[%s194 + $0x6e8] sm:$0xff]
        %v450 = vld [vmem:[%s194 + $0x6f0] sm:$0xff]
        %v451 = vld [vmem:[%s194 + $0x6f8] sm:$0xff]
        %v452 = vld [vmem:[%s194 + $0x700] sm:$0xff]
        %v453 = vld [vmem:[%s194 + $0x708] sm:$0xff]
        %v454 = vld [vmem:[%s194 + $0x710] sm:$0xff]
        %v455 = vld [vmem:[%s194 + $0x718] sm:$0xff]
        %v456 = vld [vmem:[%s194 + $0x720] sm:$0xff]
        %v457 = vld [vmem:[%s194 + $0x728] sm:$0xff]
        %v458 = vld [vmem:[%s194 + $0x730] sm:$0xff]
        %v459 = vld [vmem:[%s194 + $0x738] sm:$0xff]
        %v460 = vld [vmem:[%s194 + $0x740] sm:$0xff]
        %v461 = vld [vmem:[%s194 + $0x748] sm:$0xff]
        %v462 = vld [vmem:[%s194 + $0x750] sm:$0xff]
        %v463 = vld [vmem:[%s194 + $0x758] sm:$0xff]
        %v464 = vld [vmem:[%s194 + $0x760] sm:$0xff]
        %v465 = vld [vmem:[%s194 + $0x768] sm:$0xff]
        %v466 = vld [vmem:[%s194 + $0x770] sm:$0xff]
        %v467 = vld [vmem:[%s194 + $0x778] sm:$0xff]
        %v468 = vld [vmem:[%s194 + $0x780] sm:$0xff]
        %v469 = vld [vmem:[%s194 + $0x788] sm:$0xff]
        %v470 = vld [vmem:[%s194 + $0x790] sm:$0xff]
        %v471 = vld [vmem:[%s194 + $0x798] sm:$0xff]
        %v472 = vld [vmem:[%s194 + $0x7a0] sm:$0xff]
        %v473 = vld [vmem:[%s194 + $0x7a8] sm:$0xff]
        %v474 = vld [vmem:[%s194 + $0x7b0] sm:$0xff]
        %v475 = vld [vmem:[%s194 + $0x7b8] sm:$0xff]
        %v476 = vld [vmem:[%s194 + $0x7c0] sm:$0xff]
        %v477 = vld [vmem:[%s194 + $0x7c8] sm:$0xff]
        %v478 = vld [vmem:[%s194 + $0x7d0] sm:$0xff]
        %v479 = vld [vmem:[%s194 + $0x7d8] sm:$0xff]
        %v480 = vld [vmem:[%s194 + $0x7e0] sm:$0xff]
        %v481 = vld [vmem:[%s194 + $0x7e8] sm:$0xff]
        %v482 = vld [vmem:[%s194 + $0x7f0] sm:$0xff]
        %v483 = vld [vmem:[%s194 + $0x7f8] sm:$0xff]
        %v484 = vld [vmem:[%s194 + $0x800] sm:$0xff]
        %v485 = vld [vmem:[%s194 + $0x808] sm:$0xff]
        %v486 = vld [vmem:[%s194 + $0x810] sm:$0xff]
        %v487 = vld [vmem:[%s194 + $0x818] sm:$0xff]
        %v488 = vld [vmem:[%s194 + $0x820] sm:$0xff]
        %v489 = vld [vmem:[%s194 + $0x828] sm:$0xff]
        %v490 = vld [vmem:[%s194 + $0x830] sm:$0xff]
        %v491 = vld [vmem:[%s194 + $0x838] sm:$0xff]
        %v492 = vld [vmem:[%s194 + $0x840] sm:$0xff]
        %v493 = vld [vmem:[%s194 + $0x848] sm:$0xff]
        %v494 = vld [vmem:[%s194 + $0x850] sm:$0xff]
        %v495 = vld [vmem:[%s194 + $0x858] sm:$0xff]
        %v496 = vld [vmem:[%s194 + $0x860] sm:$0xff]
        %v497 = vld [vmem:[%s194 + $0x868] sm:$0xff]
        %v498 = vld [vmem:[%s194 + $0x870] sm:$0xff]
        %v499 = vld [vmem:[%s194 + $0x878] sm:$0xff]
        %v500 = vld [vmem:[%s194 + $0x880] sm:$0xff]
        %v501 = vld [vmem:[%s194 + $0x888] sm:$0xff]
        %v502 = vld [vmem:[%s194 + $0x890] sm:$0xff]
        %v503 = vld [vmem:[%s194 + $0x898] sm:$0xff]
        %v504 = vld [vmem:[%s194 + $0x8a0] sm:$0xff]
        %v505 = vld [vmem:[%s194 + $0x8a8] sm:$0xff]
        %v506 = vld [vmem:[%s194 + $0x8b0] sm:$0xff]
        %v507 = vld [vmem:[%s194 + $0x8b8] sm:$0xff]
        %v508 = vld [vmem:[%s194 + $0x8c0] sm:$0xff]
        %v509 = vld [vmem:[%s194 + $0x8c8] sm:$0xff]
        %v510 = vld [vmem:[%s194 + $0x8d0] sm:$0xff]
        %v511 = vld [vmem:[%s194 + $0x8d8] sm:$0xff]
        %v512 = vld [vmem:[%s194 + $0x8e0] sm:$0xff]
        %v513 = vld [vmem:[%s194 + $0x8e8] sm:$0xff]
        %v514 = vld [vmem:[%s194 + $0x8f0] sm:$0xff]
        %v515 = vld [vmem:[%s194 + $0x8f8] sm:$0xff]
        %v516 = vld [vmem:[%s194 + $0x900] sm:$0xff]
        %v517 = vld [vmem:[%s194 + $0x908] sm:$0xff]
        %v518 = vld [vmem:[%s194 + $0x910] sm:$0xff]
        %v519 = vld [vmem:[%s194 + $0x918] sm:$0xff]
        %v520 = vld [vmem:[%s194 + $0x920] sm:$0xff]
        %v521 = vld [vmem:[%s194 + $0x928] sm:$0xff]
        %v522 = vld [vmem:[%s194 + $0x930] sm:$0xff]
        %v523 = vld [vmem:[%s194 + $0x938] sm:$0xff]
        %v524 = vld [vmem:[%s194 + $0x940] sm:$0xff]
        %v525 = vld [vmem:[%s194 + $0x948] sm:$0xff]
        %v526 = vld [vmem:[%s194 + $0x950] sm:$0xff]
        %v527 = vld [vmem:[%s194 + $0x958] sm:$0xff]
        %v528 = vld [vmem:[%s194 + $0x960] sm:$0xff]
        %v529 = vld [vmem:[%s194 + $0x968] sm:$0xff]
        %v530 = vld [vmem:[%s194 + $0x970] sm:$0xff]
        %v531 = vld [vmem:[%s194 + $0x978] sm:$0xff]
        %v532 = vld [vmem:[%s194 + $0x980] sm:$0xff]
        %v533 = vld [vmem:[%s194 + $0x988] sm:$0xff]
        %v534 = vld [vmem:[%s194 + $0x990] sm:$0xff]
        %v535 = vld [vmem:[%s194 + $0x998] sm:$0xff]
        %v536 = vld [vmem:[%s194 + $0x9a0] sm:$0xff]
        %v537 = vld [vmem:[%s194 + $0x9a8] sm:$0xff]
        %v538 = vld [vmem:[%s194 + $0x9b0] sm:$0xff]
        %v539 = vld [vmem:[%s194 + $0x9b8] sm:$0xff]
        %v540 = vld [vmem:[%s194 + $0x9c0] sm:$0xff]
        %v541 = vld [vmem:[%s194 + $0x9c8] sm:$0xff]
        %v542 = vld [vmem:[%s194 + $0x9d0] sm:$0xff]
        %v543 = vld [vmem:[%s194 + $0x9d8] sm:$0xff]
        %v544 = vld [vmem:[%s194 + $0x9e0] sm:$0xff]
        %v545 = vld [vmem:[%s194 + $0x9e8] sm:$0xff]
        %v546 = vld [vmem:[%s194 + $0x9f0] sm:$0xff]
        %v547 = vld [vmem:[%s194 + $0x9f8] sm:$0xff]
        %v548 = vld [vmem:[%s194 + $0xa00] sm:$0xff]
        %v549 = vld [vmem:[%s194 + $0xa08] sm:$0xff]
        %v550 = vld [vmem:[%s194 + $0xa10] sm:$0xff]
        %v551 = vld [vmem:[%s194 + $0xa18] sm:$0xff]
        %v552 = vld [vmem:[%s194 + $0xa20] sm:$0xff]
        %v553 = vld [vmem:[%s194 + $0xa28] sm:$0xff]
        %v554 = vld [vmem:[%s194 + $0xa30] sm:$0xff]
        %v555 = vld [vmem:[%s194 + $0xa38] sm:$0xff]
        %v556 = vld [vmem:[%s194 + $0xa40] sm:$0xff]
        %v557 = vld [vmem:[%s194 + $0xa48] sm:$0xff]
        %v558 = vld [vmem:[%s194 + $0xa50] sm:$0xff]
        %v559 = vld [vmem:[%s194 + $0xa58] sm:$0xff]
        %v560 = vld [vmem:[%s194 + $0xa60] sm:$0xff]
        %v561 = vld [vmem:[%s194 + $0xa68] sm:$0xff]
        %v562 = vld [vmem:[%s194 + $0xa70] sm:$0xff]
        %v563 = vld [vmem:[%s194 + $0xa78] sm:$0xff]
        %v564 = vld [vmem:[%s194 + $0xa80] sm:$0xff]
        %v565 = vld [vmem:[%s194 + $0xa88] sm:$0xff]
        %v566 = vld [vmem:[%s194 + $0xa90] sm:$0xff]
        %v567 = vld [vmem:[%s194 + $0xa98] sm:$0xff]
        %v568 = vld [vmem:[%s194 + $0xaa0] sm:$0xff]
        %v569 = vld [vmem:[%s194 + $0xaa8] sm:$0xff]
        %v570 = vld [vmem:[%s194 + $0xab0] sm:$0xff]
        %v571 = vld [vmem:[%s194 + $0xab8] sm:$0xff]
        %v572 = vld [vmem:[%s194 + $0xac0] sm:$0xff]
        %v573 = vld [vmem:[%s194 + $0xac8] sm:$0xff]
        %v574 = vld [vmem:[%s194 + $0xad0] sm:$0xff]
        %v575 = vld [vmem:[%s194 + $0xad8] sm:$0xff]
        %v576 = vld [vmem:[%s194 + $0xae0] sm:$0xff]
        %v577 = vld [vmem:[%s194 + $0xae8] sm:$0xff]
        %v578 = vld [vmem:[%s194 + $0xaf0] sm:$0xff]
        %v579 = vld [vmem:[%s194 + $0xaf8] sm:$0xff]
        %v580 = vld [vmem:[%s194 + $0xb00] sm:$0xff]
        %v581 = vld [vmem:[%s194 + $0xb08] sm:$0xff]
        %v582 = vld [vmem:[%s194 + $0xb10] sm:$0xff]
        %v583 = vld [vmem:[%s194 + $0xb18] sm:$0xff]
        %v584 = vld [vmem:[%s194 + $0xb20] sm:$0xff]
        %v585 = vld [vmem:[%s194 + $0xb28] sm:$0xff]
        %v586 = vld [vmem:[%s194 + $0xb30] sm:$0xff]
        %v587 = vld [vmem:[%s194 + $0xb38] sm:$0xff]
        %v588 = vld [vmem:[%s194 + $0xb40] sm:$0xff]
        %v589 = vld [vmem:[%s194 + $0xb48] sm:$0xff]
        %v590 = vld [vmem:[%s194 + $0xb50] sm:$0xff]
        %v591 = vld [vmem:[%s194 + $0xb58] sm:$0xff]
        %v592 = vld [vmem:[%s194 + $0xb60] sm:$0xff]
        %v593 = vld [vmem:[%s194 + $0xb68] sm:$0xff]
        %v594 = vld [vmem:[%s194 + $0xb70] sm:$0xff]
        %v595 = vld [vmem:[%s194 + $0xb78] sm:$0xff]
        %v596 = vld [vmem:[%s194 + $0xb80] sm:$0xff]
        %v597 = vld [vmem:[%s194 + $0xb88] sm:$0xff]
        %v598 = vld [vmem:[%s194 + $0xb90] sm:$0xff]
        %v599 = vld [vmem:[%s194 + $0xb98] sm:$0xff]
        %v600 = vld [vmem:[%s194 + $0xba0] sm:$0xff]
        %v601 = vld [vmem:[%s194 + $0xba8] sm:$0xff]
        %v602 = vld [vmem:[%s194 + $0xbb0] sm:$0xff]
        %v603 = vld [vmem:[%s194 + $0xbb8] sm:$0xff]
        %v604 = vld [vmem:[%s194 + $0xbc0] sm:$0xff]
        %v605 = vld [vmem:[%s194 + $0xbc8] sm:$0xff]
        %v606 = vld [vmem:[%s194 + $0xbd0] sm:$0xff]
        %v607 = vld [vmem:[%s194 + $0xbd8] sm:$0xff]
        %v608 = vld [vmem:[%s194 + $0xbe0] sm:$0xff]
        %v609 = vld [vmem:[%s194 + $0xbe8] sm:$0xff]
        %v610 = vld [vmem:[%s194 + $0xbf0] sm:$0xff]
        %v611 = vld [vmem:[%s194 + $0xbf8] sm:$0xff]
        %v612 = vld [vmem:[%s194 + $0xc00] sm:$0xff]
        %v613 = vld [vmem:[%s194 + $0xc08] sm:$0xff]
        %v614 = vld [vmem:[%s194 + $0xc10] sm:$0xff]
        %v615 = vld [vmem:[%s194 + $0xc18] sm:$0xff]
        %v616 = vld [vmem:[%s194 + $0xc20] sm:$0xff]
        %v617 = vld [vmem:[%s194 + $0xc28] sm:$0xff]
        %v618 = vld [vmem:[%s194 + $0xc30] sm:$0xff]
        %v619 = vld [vmem:[%s194 + $0xc38] sm:$0xff]
        %v620 = vld [vmem:[%s194 + $0xc40] sm:$0xff]
        %v621 = vld [vmem:[%s194 + $0xc48] sm:$0xff]
        %v622 = vld [vmem:[%s194 + $0xc50] sm:$0xff]
        %v623 = vld [vmem:[%s194 + $0xc58] sm:$0xff]
        %v624 = vld [vmem:[%s194 + $0xc60] sm:$0xff]
        %v625 = vld [vmem:[%s194 + $0xc68] sm:$0xff]
        %v626 = vld [vmem:[%s194 + $0xc70] sm:$0xff]
        %v627 = vld [vmem:[%s194 + $0xc78] sm:$0xff]
        %v628 = vld [vmem:[%s194 + $0xc80] sm:$0xff]
        %v629 = vld [vmem:[%s194 + $0xc88] sm:$0xff]
        %v630 = vld [vmem:[%s194 + $0xc90] sm:$0xff]
        %v631 = vld [vmem:[%s194 + $0xc98] sm:$0xff]
        %v632 = vld [vmem:[%s194 + $0xca0] sm:$0xff]
        %v633 = vld [vmem:[%s194 + $0xca8] sm:$0xff]
        %v634 = vld [vmem:[%s194 + $0xcb0] sm:$0xff]
        %v635 = vld [vmem:[%s194 + $0xcb8] sm:$0xff]
        %v636 = vld [vmem:[%s194 + $0xcc0] sm:$0xff]
        %v637 = vld [vmem:[%s194 + $0xcc8] sm:$0xff]
        %v638 = vld [vmem:[%s194 + $0xcd0] sm:$0xff]
        %v639 = vld [vmem:[%s194 + $0xcd8] sm:$0xff]
        %v640 = vld [vmem:[%s194 + $0xce0] sm:$0xff]
        %v641 = vld [vmem:[%s194 + $0xce8] sm:$0xff]
        %v642 = vld [vmem:[%s194 + $0xcf0] sm:$0xff]
        %v643 = vld [vmem:[%s194 + $0xcf8] sm:$0xff]
        %v644 = vld [vmem:[%s194 + $0xd00] sm:$0xff]
        %v645 = vld [vmem:[%s194 + $0xd08] sm:$0xff]
        %v646 = vld [vmem:[%s194 + $0xd10] sm:$0xff]
        %v647 = vld [vmem:[%s194 + $0xd18] sm:$0xff]
        %v648 = vld [vmem:[%s194 + $0xd20] sm:$0xff]
        %v649 = vld [vmem:[%s194 + $0xd28] sm:$0xff]
        %v650 = vld [vmem:[%s194 + $0xd30] sm:$0xff]
        %v651 = vld [vmem:[%s194 + $0xd38] sm:$0xff]
        %v652 = vld [vmem:[%s194 + $0xd40] sm:$0xff]
        %v653 = vld [vmem:[%s194 + $0xd48] sm:$0xff]
        %v654 = vld [vmem:[%s194 + $0xd50] sm:$0xff]
        %v655 = vld [vmem:[%s194 + $0xd58] sm:$0xff]
        %v656 = vld [vmem:[%s194 + $0xd60] sm:$0xff]
        %v657 = vld [vmem:[%s194 + $0xd68] sm:$0xff]
        %v658 = vld [vmem:[%s194 + $0xd70] sm:$0xff]
        %v659 = vld [vmem:[%s194 + $0xd78] sm:$0xff]
        %v660 = vld [vmem:[%s194 + $0xd80] sm:$0xff]
        %v661 = vld [vmem:[%s194 + $0xd88] sm:$0xff]
        %v662 = vld [vmem:[%s194 + $0xd90] sm:$0xff]
        %v663 = vld [vmem:[%s194 + $0xd98] sm:$0xff]
        %v664 = vld [vmem:[%s194 + $0xda0] sm:$0xff]
        %v665 = vld [vmem:[%s194 + $0xda8] sm:$0xff]
        %v666 = vld [vmem:[%s194 + $0xdb0] sm:$0xff]
        %v667 = vld [vmem:[%s194 + $0xdb8] sm:$0xff]
        %v668 = vld [vmem:[%s194 + $0xdc0] sm:$0xff]
        %v669 = vld [vmem:[%s194 + $0xdc8] sm:$0xff]
        %v670 = vld [vmem:[%s194 + $0xdd0] sm:$0xff]
        %v671 = vld [vmem:[%s194 + $0xdd8] sm:$0xff]
        %v672 = vld [vmem:[%s194 + $0xde0] sm:$0xff]
        %v673 = vld [vmem:[%s194 + $0xde8] sm:$0xff]
        %v674 = vld [vmem:[%s194 + $0xdf0] sm:$0xff]
        %v675 = vld [vmem:[%s194 + $0xdf8] sm:$0xff]
        %v676 = vld [vmem:[%s194 + $0xe00] sm:$0xff]
        %v677 = vld [vmem:[%s194 + $0xe08] sm:$0xff]
        %v678 = vld [vmem:[%s194 + $0xe10] sm:$0xff]
        %v679 = vld [vmem:[%s194 + $0xe18] sm:$0xff]
        %v680 = vld [vmem:[%s194 + $0xe20] sm:$0xff]
        %v681 = vld [vmem:[%s194 + $0xe28] sm:$0xff]
        %v682 = vld [vmem:[%s194 + $0xe30] sm:$0xff]
        %v683 = vld [vmem:[%s194 + $0xe38] sm:$0xff]
        %v684 = vld [vmem:[%s194 + $0xe40] sm:$0xff]
        %v685 = vld [vmem:[%s194 + $0xe48] sm:$0xff]
        %v686 = vld [vmem:[%s194 + $0xe50] sm:$0xff]
        %v687 = vld [vmem:[%s194 + $0xe58] sm:$0xff]
        %v688 = vld [vmem:[%s194 + $0xe60] sm:$0xff]
        %v689 = vld [vmem:[%s194 + $0xe68] sm:$0xff]
        %v690 = vld [vmem:[%s194 + $0xe70] sm:$0xff]
        %v691 = vld [vmem:[%s194 + $0xe78] sm:$0xff]
        %v692 = vld [vmem:[%s194 + $0xe80] sm:$0xff]
        %v693 = vld [vmem:[%s194 + $0xe88] sm:$0xff]
        %v694 = vld [vmem:[%s194 + $0xe90] sm:$0xff]
        %v695 = vld [vmem:[%s194 + $0xe98] sm:$0xff]
        %v696 = vld [vmem:[%s194 + $0xea0] sm:$0xff]
        %v697 = vld [vmem:[%s194 + $0xea8] sm:$0xff]
        %v698 = vld [vmem:[%s194 + $0xeb0] sm:$0xff]
        %v699 = vld [vmem:[%s194 + $0xeb8] sm:$0xff]
        %v700 = vld [vmem:[%s194 + $0xec0] sm:$0xff]
        %v701 = vld [vmem:[%s194 + $0xec8] sm:$0xff]
        %v702 = vld [vmem:[%s194 + $0xed0] sm:$0xff]
        %v703 = vld [vmem:[%s194 + $0xed8] sm:$0xff]
        %v704 = vld [vmem:[%s194 + $0xee0] sm:$0xff]
        %v705 = vld [vmem:[%s194 + $0xee8] sm:$0xff]
        %v706 = vld [vmem:[%s194 + $0xef0] sm:$0xff]
        %v707 = vld [vmem:[%s194 + $0xef8] sm:$0xff]
        %v708 = vld [vmem:[%s194 + $0xf00] sm:$0xff]
        %v709 = vld [vmem:[%s194 + $0xf08] sm:$0xff]
        %v710 = vld [vmem:[%s194 + $0xf10] sm:$0xff]
        %v711 = vld [vmem:[%s194 + $0xf18] sm:$0xff]
        %v712 = vld [vmem:[%s194 + $0xf20] sm:$0xff]
        %v713 = vld [vmem:[%s194 + $0xf28] sm:$0xff]
        %v714 = vld [vmem:[%s194 + $0xf30] sm:$0xff]
        %v715 = vld [vmem:[%s194 + $0xf38] sm:$0xff]
        %v716 = vld [vmem:[%s194 + $0xf40] sm:$0xff]
        %v717 = vld [vmem:[%s194 + $0xf48] sm:$0xff]
        %v718 = vld [vmem:[%s194 + $0xf50] sm:$0xff]
        %v719 = vld [vmem:[%s194 + $0xf58] sm:$0xff]
        %v720 = vld [vmem:[%s194 + $0xf60] sm:$0xff]
        %v721 = vld [vmem:[%s194 + $0xf68] sm:$0xff]
        %v722 = vld [vmem:[%s194 + $0xf70] sm:$0xff]
        %v723 = vld [vmem:[%s194 + $0xf78] sm:$0xff]
        %v724 = vld [vmem:[%s194 + $0xf80] sm:$0xff]
        %v725 = vld [vmem:[%s194 + $0xf88] sm:$0xff]
        %v726 = vld [vmem:[%s194 + $0xf90] sm:$0xff]
        %v727 = vld [vmem:[%s194 + $0xf98] sm:$0xff]
        %v728 = vld [vmem:[%s194 + $0xfa0] sm:$0xff]
        %v729 = vld [vmem:[%s194 + $0xfa8] sm:$0xff]
        %v730 = vld [vmem:[%s194 + $0xfb0] sm:$0xff]
        %v731 = vld [vmem:[%s194 + $0xfb8] sm:$0xff]
        %v732 = vld [vmem:[%s194 + $0xfc0] sm:$0xff]
        %v733 = vld [vmem:[%s194 + $0xfc8] sm:$0xff]
        %v734 = vld [vmem:[%s194 + $0xfd0] sm:$0xff]
        %v735 = vld [vmem:[%s194 + $0xfd8] sm:$0xff]
        %v736 = vld [vmem:[%s194 + $0xfe0] sm:$0xff]
        %v737 = vld [vmem:[%s194 + $0xfe8] sm:$0xff]
        %s738 = scalar_lea.vmem [#allocation7], %s227
        %v739 = vld [vmem:[%s738] sm:$0xff]
        %v740 = vld [vmem:[%s738 + $0x8] sm:$0xff]
        %v741 = vld [vmem:[%s738 + $0x10] sm:$0xff]
        %v742 = vld [vmem:[%s738 + $0x18] sm:$0xff]
        %v743 = vld [vmem:[%s738 + $0x20] sm:$0xff]
        %v744 = vld [vmem:[%s738 + $0x28] sm:$0xff]
        %v745 = vld [vmem:[%s738 + $0x30] sm:$0xff]
        %v746 = vld [vmem:[%s738 + $0x38] sm:$0xff]
        %v747 = vld [vmem:[%s738 + $0x40] sm:$0xff]
        %v748 = vld [vmem:[%s738 + $0x48] sm:$0xff]
        %v749 = vld [vmem:[%s738 + $0x50] sm:$0xff]
        %v750 = vld [vmem:[%s738 + $0x58] sm:$0xff]
        %v751 = vld [vmem:[%s738 + $0x60] sm:$0xff]
        %v752 = vld [vmem:[%s738 + $0x68] sm:$0xff]
        %v753 = vld [vmem:[%s738 + $0x70] sm:$0xff]
        %v754 = vld [vmem:[%s738 + $0x78] sm:$0xff]
        %v755 = vld [vmem:[%s738 + $0x80] sm:$0xff]
        %v756 = vld [vmem:[%s738 + $0x88] sm:$0xff]
        %v757 = vld [vmem:[%s738 + $0x90] sm:$0xff]
        %v758 = vld [vmem:[%s738 + $0x98] sm:$0xff]
        %v759 = vld [vmem:[%s738 + $0xa0] sm:$0xff]
        %v760 = vld [vmem:[%s738 + $0xa8] sm:$0xff]
        %v761 = vld [vmem:[%s738 + $0xb0] sm:$0xff]
        %v762 = vld [vmem:[%s738 + $0xb8] sm:$0xff]
        %v763 = vld [vmem:[%s738 + $0xc0] sm:$0xff]
        %v764 = vld [vmem:[%s738 + $0xc8] sm:$0xff]
        %v765 = vld [vmem:[%s738 + $0xd0] sm:$0xff]
        %v766 = vld [vmem:[%s738 + $0xd8] sm:$0xff]
        %v767 = vld [vmem:[%s738 + $0xe0] sm:$0xff]
        %v768 = vld [vmem:[%s738 + $0xe8] sm:$0xff]
        %v769 = vld [vmem:[%s738 + $0xf0] sm:$0xff]
        %v770 = vld [vmem:[%s738 + $0xf8] sm:$0xff]
        %v771 = vld [vmem:[%s738 + $0x100] sm:$0xff]
        %v772 = vld [vmem:[%s738 + $0x108] sm:$0xff]
        %v773 = vld [vmem:[%s738 + $0x110] sm:$0xff]
        %v774 = vld [vmem:[%s738 + $0x118] sm:$0xff]
        %v775 = vld [vmem:[%s738 + $0x120] sm:$0xff]
        %v776 = vld [vmem:[%s738 + $0x128] sm:$0xff]
        %v777 = vld [vmem:[%s738 + $0x130] sm:$0xff]
        %v778 = vld [vmem:[%s738 + $0x138] sm:$0xff]
        %v779 = vld [vmem:[%s738 + $0x140] sm:$0xff]
        %v780 = vld [vmem:[%s738 + $0x148] sm:$0xff]
        %v781 = vld [vmem:[%s738 + $0x150] sm:$0xff]
        %v782 = vld [vmem:[%s738 + $0x158] sm:$0xff]
        %v783 = vld [vmem:[%s738 + $0x160] sm:$0xff]
        %v784 = vld [vmem:[%s738 + $0x168] sm:$0xff]
        %v785 = vld [vmem:[%s738 + $0x170] sm:$0xff]
        %v786 = vld [vmem:[%s738 + $0x178] sm:$0xff]
        %v787 = vld [vmem:[%s738 + $0x180] sm:$0xff]
        %v788 = vld [vmem:[%s738 + $0x188] sm:$0xff]
        %v789 = vld [vmem:[%s738 + $0x190] sm:$0xff]
        %v790 = vld [vmem:[%s738 + $0x198] sm:$0xff]
        %v791 = vld [vmem:[%s738 + $0x1a0] sm:$0xff]
        %v792 = vld [vmem:[%s738 + $0x1a8] sm:$0xff]
        %v793 = vld [vmem:[%s738 + $0x1b0] sm:$0xff]
        %v794 = vld [vmem:[%s738 + $0x1b8] sm:$0xff]
        %v795 = vld [vmem:[%s738 + $0x1c0] sm:$0xff]
        %v796 = vld [vmem:[%s738 + $0x1c8] sm:$0xff]
        %v797 = vld [vmem:[%s738 + $0x1d0] sm:$0xff]
        %v798 = vld [vmem:[%s738 + $0x1d8] sm:$0xff]
        %v799 = vld [vmem:[%s738 + $0x1e0] sm:$0xff]
        %v800 = vld [vmem:[%s738 + $0x1e8] sm:$0xff]
        %v801 = vld [vmem:[%s738 + $0x1f0] sm:$0xff]
        %v802 = vld [vmem:[%s738 + $0x1f8] sm:$0xff]
        %v803 = vld [vmem:[%s738 + $0x200] sm:$0xff]
        %v804 = vld [vmem:[%s738 + $0x208] sm:$0xff]
        %v805 = vld [vmem:[%s738 + $0x210] sm:$0xff]
        %v806 = vld [vmem:[%s738 + $0x218] sm:$0xff]
        %v807 = vld [vmem:[%s738 + $0x220] sm:$0xff]
        %v808 = vld [vmem:[%s738 + $0x228] sm:$0xff]
        %v809 = vld [vmem:[%s738 + $0x230] sm:$0xff]
        %v810 = vld [vmem:[%s738 + $0x238] sm:$0xff]
        %v811 = vld [vmem:[%s738 + $0x240] sm:$0xff]
        %v812 = vld [vmem:[%s738 + $0x248] sm:$0xff]
        %v813 = vld [vmem:[%s738 + $0x250] sm:$0xff]
        %v814 = vld [vmem:[%s738 + $0x258] sm:$0xff]
        %v815 = vld [vmem:[%s738 + $0x260] sm:$0xff]
        %v816 = vld [vmem:[%s738 + $0x268] sm:$0xff]
        %v817 = vld [vmem:[%s738 + $0x270] sm:$0xff]
        %v818 = vld [vmem:[%s738 + $0x278] sm:$0xff]
        %v819 = vld [vmem:[%s738 + $0x280] sm:$0xff]
        %v820 = vld [vmem:[%s738 + $0x288] sm:$0xff]
        %v821 = vld [vmem:[%s738 + $0x290] sm:$0xff]
        %v822 = vld [vmem:[%s738 + $0x298] sm:$0xff]
        %v823 = vld [vmem:[%s738 + $0x2a0] sm:$0xff]
        %v824 = vld [vmem:[%s738 + $0x2a8] sm:$0xff]
        %v825 = vld [vmem:[%s738 + $0x2b0] sm:$0xff]
        %v826 = vld [vmem:[%s738 + $0x2b8] sm:$0xff]
        %v827 = vld [vmem:[%s738 + $0x2c0] sm:$0xff]
        %v828 = vld [vmem:[%s738 + $0x2c8] sm:$0xff]
        %v829 = vld [vmem:[%s738 + $0x2d0] sm:$0xff]
        %v830 = vld [vmem:[%s738 + $0x2d8] sm:$0xff]
        %v831 = vld [vmem:[%s738 + $0x2e0] sm:$0xff]
        %v832 = vld [vmem:[%s738 + $0x2e8] sm:$0xff]
        %v833 = vld [vmem:[%s738 + $0x2f0] sm:$0xff]
        %v834 = vld [vmem:[%s738 + $0x2f8] sm:$0xff]
        %v835 = vld [vmem:[%s738 + $0x300] sm:$0xff]
        %v836 = vld [vmem:[%s738 + $0x308] sm:$0xff]
        %v837 = vld [vmem:[%s738 + $0x310] sm:$0xff]
        %v838 = vld [vmem:[%s738 + $0x318] sm:$0xff]
        %v839 = vld [vmem:[%s738 + $0x320] sm:$0xff]
        %v840 = vld [vmem:[%s738 + $0x328] sm:$0xff]
        %v841 = vld [vmem:[%s738 + $0x330] sm:$0xff]
        %v842 = vld [vmem:[%s738 + $0x338] sm:$0xff]
        %v843 = vld [vmem:[%s738 + $0x340] sm:$0xff]
        %v844 = vld [vmem:[%s738 + $0x348] sm:$0xff]
        %v845 = vld [vmem:[%s738 + $0x350] sm:$0xff]
        %v846 = vld [vmem:[%s738 + $0x358] sm:$0xff]
        %v847 = vld [vmem:[%s738 + $0x360] sm:$0xff]
        %v848 = vld [vmem:[%s738 + $0x368] sm:$0xff]
        %v849 = vld [vmem:[%s738 + $0x370] sm:$0xff]
        %v850 = vld [vmem:[%s738 + $0x378] sm:$0xff]
        %v851 = vld [vmem:[%s738 + $0x380] sm:$0xff]
        %v852 = vld [vmem:[%s738 + $0x388] sm:$0xff]
        %v853 = vld [vmem:[%s738 + $0x390] sm:$0xff]
        %v854 = vld [vmem:[%s738 + $0x398] sm:$0xff]
        %v855 = vld [vmem:[%s738 + $0x3a0] sm:$0xff]
        %v856 = vld [vmem:[%s738 + $0x3a8] sm:$0xff]
        %v857 = vld [vmem:[%s738 + $0x3b0] sm:$0xff]
        %v858 = vld [vmem:[%s738 + $0x3b8] sm:$0xff]
        %v859 = vld [vmem:[%s738 + $0x3c0] sm:$0xff]
        %v860 = vld [vmem:[%s738 + $0x3c8] sm:$0xff]
        %v861 = vld [vmem:[%s738 + $0x3d0] sm:$0xff]
        %v862 = vld [vmem:[%s738 + $0x3d8] sm:$0xff]
        %v863 = vld [vmem:[%s738 + $0x3e0] sm:$0xff]
        %v864 = vld [vmem:[%s738 + $0x3e8] sm:$0xff]
        %v865 = vld [vmem:[%s738 + $0x3f0] sm:$0xff]
        %v866 = vld [vmem:[%s738 + $0x3f8] sm:$0xff]
        %v867 = vld [vmem:[%s738 + $0x400] sm:$0xff]
        %v868 = vld [vmem:[%s738 + $0x408] sm:$0xff]
        %v869 = vld [vmem:[%s738 + $0x410] sm:$0xff]
        %v870 = vld [vmem:[%s738 + $0x418] sm:$0xff]
        %v871 = vld [vmem:[%s738 + $0x420] sm:$0xff]
        %v872 = vld [vmem:[%s738 + $0x428] sm:$0xff]
        %v873 = vld [vmem:[%s738 + $0x430] sm:$0xff]
        %v874 = vld [vmem:[%s738 + $0x438] sm:$0xff]
        %v875 = vld [vmem:[%s738 + $0x440] sm:$0xff]
        %v876 = vld [vmem:[%s738 + $0x448] sm:$0xff]
        %v877 = vld [vmem:[%s738 + $0x450] sm:$0xff]
        %v878 = vld [vmem:[%s738 + $0x458] sm:$0xff]
        %v879 = vld [vmem:[%s738 + $0x460] sm:$0xff]
        %v880 = vld [vmem:[%s738 + $0x468] sm:$0xff]
        %v881 = vld [vmem:[%s738 + $0x470] sm:$0xff]
        %v882 = vld [vmem:[%s738 + $0x478] sm:$0xff]
        %v883 = vld [vmem:[%s738 + $0x480] sm:$0xff]
        %v884 = vld [vmem:[%s738 + $0x488] sm:$0xff]
        %v885 = vld [vmem:[%s738 + $0x490] sm:$0xff]
        %v886 = vld [vmem:[%s738 + $0x498] sm:$0xff]
        %v887 = vld [vmem:[%s738 + $0x4a0] sm:$0xff]
        %v888 = vld [vmem:[%s738 + $0x4a8] sm:$0xff]
        %v889 = vld [vmem:[%s738 + $0x4b0] sm:$0xff]
        %v890 = vld [vmem:[%s738 + $0x4b8] sm:$0xff]
        %v891 = vld [vmem:[%s738 + $0x4c0] sm:$0xff]
        %v892 = vld [vmem:[%s738 + $0x4c8] sm:$0xff]
        %v893 = vld [vmem:[%s738 + $0x4d0] sm:$0xff]
        %v894 = vld [vmem:[%s738 + $0x4d8] sm:$0xff]
        %v895 = vld [vmem:[%s738 + $0x4e0] sm:$0xff]
        %v896 = vld [vmem:[%s738 + $0x4e8] sm:$0xff]
        %v897 = vld [vmem:[%s738 + $0x4f0] sm:$0xff]
        %v898 = vld [vmem:[%s738 + $0x4f8] sm:$0xff]
        %v899 = vld [vmem:[%s738 + $0x500] sm:$0xff]
        %v900 = vld [vmem:[%s738 + $0x508] sm:$0xff]
        %v901 = vld [vmem:[%s738 + $0x510] sm:$0xff]
        %v902 = vld [vmem:[%s738 + $0x518] sm:$0xff]
        %v903 = vld [vmem:[%s738 + $0x520] sm:$0xff]
        %v904 = vld [vmem:[%s738 + $0x528] sm:$0xff]
        %v905 = vld [vmem:[%s738 + $0x530] sm:$0xff]
        %v906 = vld [vmem:[%s738 + $0x538] sm:$0xff]
        %v907 = vld [vmem:[%s738 + $0x540] sm:$0xff]
        %v908 = vld [vmem:[%s738 + $0x548] sm:$0xff]
        %v909 = vld [vmem:[%s738 + $0x550] sm:$0xff]
        %v910 = vld [vmem:[%s738 + $0x558] sm:$0xff]
        %v911 = vld [vmem:[%s738 + $0x560] sm:$0xff]
        %v912 = vld [vmem:[%s738 + $0x568] sm:$0xff]
        %v913 = vld [vmem:[%s738 + $0x570] sm:$0xff]
        %v914 = vld [vmem:[%s738 + $0x578] sm:$0xff]
        %v915 = vld [vmem:[%s738 + $0x580] sm:$0xff]
        %v916 = vld [vmem:[%s738 + $0x588] sm:$0xff]
        %v917 = vld [vmem:[%s738 + $0x590] sm:$0xff]
        %v918 = vld [vmem:[%s738 + $0x598] sm:$0xff]
        %v919 = vld [vmem:[%s738 + $0x5a0] sm:$0xff]
        %v920 = vld [vmem:[%s738 + $0x5a8] sm:$0xff]
        %v921 = vld [vmem:[%s738 + $0x5b0] sm:$0xff]
        %v922 = vld [vmem:[%s738 + $0x5b8] sm:$0xff]
        %v923 = vld [vmem:[%s738 + $0x5c0] sm:$0xff]
        %v924 = vld [vmem:[%s738 + $0x5c8] sm:$0xff]
        %v925 = vld [vmem:[%s738 + $0x5d0] sm:$0xff]
        %v926 = vld [vmem:[%s738 + $0x5d8] sm:$0xff]
        %v927 = vld [vmem:[%s738 + $0x5e0] sm:$0xff]
        %v928 = vld [vmem:[%s738 + $0x5e8] sm:$0xff]
        %v929 = vld [vmem:[%s738 + $0x5f0] sm:$0xff]
        %v930 = vld [vmem:[%s738 + $0x5f8] sm:$0xff]
        %v931 = vld [vmem:[%s738 + $0x600] sm:$0xff]
        %v932 = vld [vmem:[%s738 + $0x608] sm:$0xff]
        %v933 = vld [vmem:[%s738 + $0x610] sm:$0xff]
        %v934 = vld [vmem:[%s738 + $0x618] sm:$0xff]
        %v935 = vld [vmem:[%s738 + $0x620] sm:$0xff]
        %v936 = vld [vmem:[%s738 + $0x628] sm:$0xff]
        %v937 = vld [vmem:[%s738 + $0x630] sm:$0xff]
        %v938 = vld [vmem:[%s738 + $0x638] sm:$0xff]
        %v939 = vld [vmem:[%s738 + $0x640] sm:$0xff]
        %v940 = vld [vmem:[%s738 + $0x648] sm:$0xff]
        %v941 = vld [vmem:[%s738 + $0x650] sm:$0xff]
        %v942 = vld [vmem:[%s738 + $0x658] sm:$0xff]
        %v943 = vld [vmem:[%s738 + $0x660] sm:$0xff]
        %v944 = vld [vmem:[%s738 + $0x668] sm:$0xff]
        %v945 = vld [vmem:[%s738 + $0x670] sm:$0xff]
        %v946 = vld [vmem:[%s738 + $0x678] sm:$0xff]
        %v947 = vld [vmem:[%s738 + $0x680] sm:$0xff]
        %v948 = vld [vmem:[%s738 + $0x688] sm:$0xff]
        %v949 = vld [vmem:[%s738 + $0x690] sm:$0xff]
        %v950 = vld [vmem:[%s738 + $0x698] sm:$0xff]
        %v951 = vld [vmem:[%s738 + $0x6a0] sm:$0xff]
        %v952 = vld [vmem:[%s738 + $0x6a8] sm:$0xff]
        %v953 = vld [vmem:[%s738 + $0x6b0] sm:$0xff]
        %v954 = vld [vmem:[%s738 + $0x6b8] sm:$0xff]
        %v955 = vld [vmem:[%s738 + $0x6c0] sm:$0xff]
        %v956 = vld [vmem:[%s738 + $0x6c8] sm:$0xff]
        %v957 = vld [vmem:[%s738 + $0x6d0] sm:$0xff]
        %v958 = vld [vmem:[%s738 + $0x6d8] sm:$0xff]
        %v959 = vld [vmem:[%s738 + $0x6e0] sm:$0xff]
        %v960 = vld [vmem:[%s738 + $0x6e8] sm:$0xff]
        %v961 = vld [vmem:[%s738 + $0x6f0] sm:$0xff]
        %v962 = vld [vmem:[%s738 + $0x6f8] sm:$0xff]
        %v963 = vld [vmem:[%s738 + $0x700] sm:$0xff]
        %v964 = vld [vmem:[%s738 + $0x708] sm:$0xff]
        %v965 = vld [vmem:[%s738 + $0x710] sm:$0xff]
        %v966 = vld [vmem:[%s738 + $0x718] sm:$0xff]
        %v967 = vld [vmem:[%s738 + $0x720] sm:$0xff]
        %v968 = vld [vmem:[%s738 + $0x728] sm:$0xff]
        %v969 = vld [vmem:[%s738 + $0x730] sm:$0xff]
        %v970 = vld [vmem:[%s738 + $0x738] sm:$0xff]
        %v971 = vld [vmem:[%s738 + $0x740] sm:$0xff]
        %v972 = vld [vmem:[%s738 + $0x748] sm:$0xff]
        %v973 = vld [vmem:[%s738 + $0x750] sm:$0xff]
        %v974 = vld [vmem:[%s738 + $0x758] sm:$0xff]
        %v975 = vld [vmem:[%s738 + $0x760] sm:$0xff]
        %v976 = vld [vmem:[%s738 + $0x768] sm:$0xff]
        %v977 = vld [vmem:[%s738 + $0x770] sm:$0xff]
        %v978 = vld [vmem:[%s738 + $0x778] sm:$0xff]
        %v979 = vld [vmem:[%s738 + $0x780] sm:$0xff]
        %v980 = vld [vmem:[%s738 + $0x788] sm:$0xff]
        %v981 = vld [vmem:[%s738 + $0x790] sm:$0xff]
        %v982 = vld [vmem:[%s738 + $0x798] sm:$0xff]
        %v983 = vld [vmem:[%s738 + $0x7a0] sm:$0xff]
        %v984 = vld [vmem:[%s738 + $0x7a8] sm:$0xff]
        %v985 = vld [vmem:[%s738 + $0x7b0] sm:$0xff]
        %v986 = vld [vmem:[%s738 + $0x7b8] sm:$0xff]
        %v987 = vld [vmem:[%s738 + $0x7c0] sm:$0xff]
        %v988 = vld [vmem:[%s738 + $0x7c8] sm:$0xff]
        %v989 = vld [vmem:[%s738 + $0x7d0] sm:$0xff]
        %v990 = vld [vmem:[%s738 + $0x7d8] sm:$0xff]
        %v991 = vld [vmem:[%s738 + $0x7e0] sm:$0xff]
        %v992 = vld [vmem:[%s738 + $0x7e8] sm:$0xff]
        %v993 = vld [vmem:[%s738 + $0x7f0] sm:$0xff]
        %v994 = vld [vmem:[%s738 + $0x7f8] sm:$0xff]
        %v995 = vld [vmem:[%s738 + $0x800] sm:$0xff]
        %v996 = vld [vmem:[%s738 + $0x808] sm:$0xff]
        %v997 = vld [vmem:[%s738 + $0x810] sm:$0xff]
        %v998 = vld [vmem:[%s738 + $0x818] sm:$0xff]
        %v999 = vld [vmem:[%s738 + $0x820] sm:$0xff]
        %v1000 = vld [vmem:[%s738 + $0x828] sm:$0xff]
        %v1001 = vld [vmem:[%s738 + $0x830] sm:$0xff]
        %v1002 = vld [vmem:[%s738 + $0x838] sm:$0xff]
        %v1003 = vld [vmem:[%s738 + $0x840] sm:$0xff]
        %v1004 = vld [vmem:[%s738 + $0x848] sm:$0xff]
        %v1005 = vld [vmem:[%s738 + $0x850] sm:$0xff]
        %v1006 = vld [vmem:[%s738 + $0x858] sm:$0xff]
        %v1007 = vld [vmem:[%s738 + $0x860] sm:$0xff]
        %v1008 = vld [vmem:[%s738 + $0x868] sm:$0xff]
        %v1009 = vld [vmem:[%s738 + $0x870] sm:$0xff]
        %v1010 = vld [vmem:[%s738 + $0x878] sm:$0xff]
        %v1011 = vld [vmem:[%s738 + $0x880] sm:$0xff]
        %v1012 = vld [vmem:[%s738 + $0x888] sm:$0xff]
        %v1013 = vld [vmem:[%s738 + $0x890] sm:$0xff]
        %v1014 = vld [vmem:[%s738 + $0x898] sm:$0xff]
        %v1015 = vld [vmem:[%s738 + $0x8a0] sm:$0xff]
        %v1016 = vld [vmem:[%s738 + $0x8a8] sm:$0xff]
        %v1017 = vld [vmem:[%s738 + $0x8b0] sm:$0xff]
        %v1018 = vld [vmem:[%s738 + $0x8b8] sm:$0xff]
        %v1019 = vld [vmem:[%s738 + $0x8c0] sm:$0xff]
        %v1020 = vld [vmem:[%s738 + $0x8c8] sm:$0xff]
        %v1021 = vld [vmem:[%s738 + $0x8d0] sm:$0xff]
        %v1022 = vld [vmem:[%s738 + $0x8d8] sm:$0xff]
        %v1023 = vld [vmem:[%s738 + $0x8e0] sm:$0xff]
        %v1024 = vld [vmem:[%s738 + $0x8e8] sm:$0xff]
        %v1025 = vld [vmem:[%s738 + $0x8f0] sm:$0xff]
        %v1026 = vld [vmem:[%s738 + $0x8f8] sm:$0xff]
        %v1027 = vld [vmem:[%s738 + $0x900] sm:$0xff]
        %v1028 = vld [vmem:[%s738 + $0x908] sm:$0xff]
        %v1029 = vld [vmem:[%s738 + $0x910] sm:$0xff]
        %v1030 = vld [vmem:[%s738 + $0x918] sm:$0xff]
        %v1031 = vld [vmem:[%s738 + $0x920] sm:$0xff]
        %v1032 = vld [vmem:[%s738 + $0x928] sm:$0xff]
        %v1033 = vld [vmem:[%s738 + $0x930] sm:$0xff]
        %v1034 = vld [vmem:[%s738 + $0x938] sm:$0xff]
        %v1035 = vld [vmem:[%s738 + $0x940] sm:$0xff]
        %v1036 = vld [vmem:[%s738 + $0x948] sm:$0xff]
        %v1037 = vld [vmem:[%s738 + $0x950] sm:$0xff]
        %v1038 = vld [vmem:[%s738 + $0x958] sm:$0xff]
        %v1039 = vld [vmem:[%s738 + $0x960] sm:$0xff]
        %v1040 = vld [vmem:[%s738 + $0x968] sm:$0xff]
        %v1041 = vld [vmem:[%s738 + $0x970] sm:$0xff]
        %v1042 = vld [vmem:[%s738 + $0x978] sm:$0xff]
        %v1043 = vld [vmem:[%s738 + $0x980] sm:$0xff]
        %v1044 = vld [vmem:[%s738 + $0x988] sm:$0xff]
        %v1045 = vld [vmem:[%s738 + $0x990] sm:$0xff]
        %v1046 = vld [vmem:[%s738 + $0x998] sm:$0xff]
        %v1047 = vld [vmem:[%s738 + $0x9a0] sm:$0xff]
        %v1048 = vld [vmem:[%s738 + $0x9a8] sm:$0xff]
        %v1049 = vld [vmem:[%s738 + $0x9b0] sm:$0xff]
        %v1050 = vld [vmem:[%s738 + $0x9b8] sm:$0xff]
        %v1051 = vld [vmem:[%s738 + $0x9c0] sm:$0xff]
        %v1052 = vld [vmem:[%s738 + $0x9c8] sm:$0xff]
        %v1053 = vld [vmem:[%s738 + $0x9d0] sm:$0xff]
        %v1054 = vld [vmem:[%s738 + $0x9d8] sm:$0xff]
        %v1055 = vld [vmem:[%s738 + $0x9e0] sm:$0xff]
        %v1056 = vld [vmem:[%s738 + $0x9e8] sm:$0xff]
        %v1057 = vld [vmem:[%s738 + $0x9f0] sm:$0xff]
        %v1058 = vld [vmem:[%s738 + $0x9f8] sm:$0xff]
        %v1059 = vld [vmem:[%s738 + $0xa00] sm:$0xff]
        %v1060 = vld [vmem:[%s738 + $0xa08] sm:$0xff]
        %v1061 = vld [vmem:[%s738 + $0xa10] sm:$0xff]
        %v1062 = vld [vmem:[%s738 + $0xa18] sm:$0xff]
        %v1063 = vld [vmem:[%s738 + $0xa20] sm:$0xff]
        %v1064 = vld [vmem:[%s738 + $0xa28] sm:$0xff]
        %v1065 = vld [vmem:[%s738 + $0xa30] sm:$0xff]
        %v1066 = vld [vmem:[%s738 + $0xa38] sm:$0xff]
        %v1067 = vld [vmem:[%s738 + $0xa40] sm:$0xff]
        %v1068 = vld [vmem:[%s738 + $0xa48] sm:$0xff]
        %v1069 = vld [vmem:[%s738 + $0xa50] sm:$0xff]
        %v1070 = vld [vmem:[%s738 + $0xa58] sm:$0xff]
        %v1071 = vld [vmem:[%s738 + $0xa60] sm:$0xff]
        %v1072 = vld [vmem:[%s738 + $0xa68] sm:$0xff]
        %v1073 = vld [vmem:[%s738 + $0xa70] sm:$0xff]
        %v1074 = vld [vmem:[%s738 + $0xa78] sm:$0xff]
        %v1075 = vld [vmem:[%s738 + $0xa80] sm:$0xff]
        %v1076 = vld [vmem:[%s738 + $0xa88] sm:$0xff]
        %v1077 = vld [vmem:[%s738 + $0xa90] sm:$0xff]
        %v1078 = vld [vmem:[%s738 + $0xa98] sm:$0xff]
        %v1079 = vld [vmem:[%s738 + $0xaa0] sm:$0xff]
        %v1080 = vld [vmem:[%s738 + $0xaa8] sm:$0xff]
        %v1081 = vld [vmem:[%s738 + $0xab0] sm:$0xff]
        %v1082 = vld [vmem:[%s738 + $0xab8] sm:$0xff]
        %v1083 = vld [vmem:[%s738 + $0xac0] sm:$0xff]
        %v1084 = vld [vmem:[%s738 + $0xac8] sm:$0xff]
        %v1085 = vld [vmem:[%s738 + $0xad0] sm:$0xff]
        %v1086 = vld [vmem:[%s738 + $0xad8] sm:$0xff]
        %v1087 = vld [vmem:[%s738 + $0xae0] sm:$0xff]
        %v1088 = vld [vmem:[%s738 + $0xae8] sm:$0xff]
        %v1089 = vld [vmem:[%s738 + $0xaf0] sm:$0xff]
        %v1090 = vld [vmem:[%s738 + $0xaf8] sm:$0xff]
        %v1091 = vld [vmem:[%s738 + $0xb00] sm:$0xff]
        %v1092 = vld [vmem:[%s738 + $0xb08] sm:$0xff]
        %v1093 = vld [vmem:[%s738 + $0xb10] sm:$0xff]
        %v1094 = vld [vmem:[%s738 + $0xb18] sm:$0xff]
        %v1095 = vld [vmem:[%s738 + $0xb20] sm:$0xff]
        %v1096 = vld [vmem:[%s738 + $0xb28] sm:$0xff]
        %v1097 = vld [vmem:[%s738 + $0xb30] sm:$0xff]
        %v1098 = vld [vmem:[%s738 + $0xb38] sm:$0xff]
        %v1099 = vld [vmem:[%s738 + $0xb40] sm:$0xff]
        %v1100 = vld [vmem:[%s738 + $0xb48] sm:$0xff]
        %v1101 = vld [vmem:[%s738 + $0xb50] sm:$0xff]
        %v1102 = vld [vmem:[%s738 + $0xb58] sm:$0xff]
        %v1103 = vld [vmem:[%s738 + $0xb60] sm:$0xff]
        %v1104 = vld [vmem:[%s738 + $0xb68] sm:$0xff]
        %v1105 = vld [vmem:[%s738 + $0xb70] sm:$0xff]
        %v1106 = vld [vmem:[%s738 + $0xb78] sm:$0xff]
        %v1107 = vld [vmem:[%s738 + $0xb80] sm:$0xff]
        %v1108 = vld [vmem:[%s738 + $0xb88] sm:$0xff]
        %v1109 = vld [vmem:[%s738 + $0xb90] sm:$0xff]
        %v1110 = vld [vmem:[%s738 + $0xb98] sm:$0xff]
        %v1111 = vld [vmem:[%s738 + $0xba0] sm:$0xff]
        %v1112 = vld [vmem:[%s738 + $0xba8] sm:$0xff]
        %v1113 = vld [vmem:[%s738 + $0xbb0] sm:$0xff]
        %v1114 = vld [vmem:[%s738 + $0xbb8] sm:$0xff]
        %v1115 = vld [vmem:[%s738 + $0xbc0] sm:$0xff]
        %v1116 = vld [vmem:[%s738 + $0xbc8] sm:$0xff]
        %v1117 = vld [vmem:[%s738 + $0xbd0] sm:$0xff]
        %v1118 = vld [vmem:[%s738 + $0xbd8] sm:$0xff]
        %v1119 = vld [vmem:[%s738 + $0xbe0] sm:$0xff]
        %v1120 = vld [vmem:[%s738 + $0xbe8] sm:$0xff]
        %v1121 = vld [vmem:[%s738 + $0xbf0] sm:$0xff]
        %v1122 = vld [vmem:[%s738 + $0xbf8] sm:$0xff]
        %v1123 = vld [vmem:[%s738 + $0xc00] sm:$0xff]
        %v1124 = vld [vmem:[%s738 + $0xc08] sm:$0xff]
        %v1125 = vld [vmem:[%s738 + $0xc10] sm:$0xff]
        %v1126 = vld [vmem:[%s738 + $0xc18] sm:$0xff]
        %v1127 = vld [vmem:[%s738 + $0xc20] sm:$0xff]
        %v1128 = vld [vmem:[%s738 + $0xc28] sm:$0xff]
        %v1129 = vld [vmem:[%s738 + $0xc30] sm:$0xff]
        %v1130 = vld [vmem:[%s738 + $0xc38] sm:$0xff]
        %v1131 = vld [vmem:[%s738 + $0xc40] sm:$0xff]
        %v1132 = vld [vmem:[%s738 + $0xc48] sm:$0xff]
        %v1133 = vld [vmem:[%s738 + $0xc50] sm:$0xff]
        %v1134 = vld [vmem:[%s738 + $0xc58] sm:$0xff]
        %v1135 = vld [vmem:[%s738 + $0xc60] sm:$0xff]
        %v1136 = vld [vmem:[%s738 + $0xc68] sm:$0xff]
        %v1137 = vld [vmem:[%s738 + $0xc70] sm:$0xff]
        %v1138 = vld [vmem:[%s738 + $0xc78] sm:$0xff]
        %v1139 = vld [vmem:[%s738 + $0xc80] sm:$0xff]
        %v1140 = vld [vmem:[%s738 + $0xc88] sm:$0xff]
        %v1141 = vld [vmem:[%s738 + $0xc90] sm:$0xff]
        %v1142 = vld [vmem:[%s738 + $0xc98] sm:$0xff]
        %v1143 = vld [vmem:[%s738 + $0xca0] sm:$0xff]
        %v1144 = vld [vmem:[%s738 + $0xca8] sm:$0xff]
        %v1145 = vld [vmem:[%s738 + $0xcb0] sm:$0xff]
        %v1146 = vld [vmem:[%s738 + $0xcb8] sm:$0xff]
        %v1147 = vld [vmem:[%s738 + $0xcc0] sm:$0xff]
        %v1148 = vld [vmem:[%s738 + $0xcc8] sm:$0xff]
        %v1149 = vld [vmem:[%s738 + $0xcd0] sm:$0xff]
        %v1150 = vld [vmem:[%s738 + $0xcd8] sm:$0xff]
        %v1151 = vld [vmem:[%s738 + $0xce0] sm:$0xff]
        %v1152 = vld [vmem:[%s738 + $0xce8] sm:$0xff]
        %v1153 = vld [vmem:[%s738 + $0xcf0] sm:$0xff]
        %v1154 = vld [vmem:[%s738 + $0xcf8] sm:$0xff]
        %v1155 = vld [vmem:[%s738 + $0xd00] sm:$0xff]
        %v1156 = vld [vmem:[%s738 + $0xd08] sm:$0xff]
        %v1157 = vld [vmem:[%s738 + $0xd10] sm:$0xff]
        %v1158 = vld [vmem:[%s738 + $0xd18] sm:$0xff]
        %v1159 = vld [vmem:[%s738 + $0xd20] sm:$0xff]
        %v1160 = vld [vmem:[%s738 + $0xd28] sm:$0xff]
        %v1161 = vld [vmem:[%s738 + $0xd30] sm:$0xff]
        %v1162 = vld [vmem:[%s738 + $0xd38] sm:$0xff]
        %v1163 = vld [vmem:[%s738 + $0xd40] sm:$0xff]
        %v1164 = vld [vmem:[%s738 + $0xd48] sm:$0xff]
        %v1165 = vld [vmem:[%s738 + $0xd50] sm:$0xff]
        %v1166 = vld [vmem:[%s738 + $0xd58] sm:$0xff]
        %v1167 = vld [vmem:[%s738 + $0xd60] sm:$0xff]
        %v1168 = vld [vmem:[%s738 + $0xd68] sm:$0xff]
        %v1169 = vld [vmem:[%s738 + $0xd70] sm:$0xff]
        %v1170 = vld [vmem:[%s738 + $0xd78] sm:$0xff]
        %v1171 = vld [vmem:[%s738 + $0xd80] sm:$0xff]
        %v1172 = vld [vmem:[%s738 + $0xd88] sm:$0xff]
        %v1173 = vld [vmem:[%s738 + $0xd90] sm:$0xff]
        %v1174 = vld [vmem:[%s738 + $0xd98] sm:$0xff]
        %v1175 = vld [vmem:[%s738 + $0xda0] sm:$0xff]
        %v1176 = vld [vmem:[%s738 + $0xda8] sm:$0xff]
        %v1177 = vld [vmem:[%s738 + $0xdb0] sm:$0xff]
        %v1178 = vld [vmem:[%s738 + $0xdb8] sm:$0xff]
        %v1179 = vld [vmem:[%s738 + $0xdc0] sm:$0xff]
        %v1180 = vld [vmem:[%s738 + $0xdc8] sm:$0xff]
        %v1181 = vld [vmem:[%s738 + $0xdd0] sm:$0xff]
        %v1182 = vld [vmem:[%s738 + $0xdd8] sm:$0xff]
        %v1183 = vld [vmem:[%s738 + $0xde0] sm:$0xff]
        %v1184 = vld [vmem:[%s738 + $0xde8] sm:$0xff]
        %v1185 = vld [vmem:[%s738 + $0xdf0] sm:$0xff]
        %v1186 = vld [vmem:[%s738 + $0xdf8] sm:$0xff]
        %v1187 = vld [vmem:[%s738 + $0xe00] sm:$0xff]
        %v1188 = vld [vmem:[%s738 + $0xe08] sm:$0xff]
        %v1189 = vld [vmem:[%s738 + $0xe10] sm:$0xff]
        %v1190 = vld [vmem:[%s738 + $0xe18] sm:$0xff]
        %v1191 = vld [vmem:[%s738 + $0xe20] sm:$0xff]
        %v1192 = vld [vmem:[%s738 + $0xe28] sm:$0xff]
        %v1193 = vld [vmem:[%s738 + $0xe30] sm:$0xff]
        %v1194 = vld [vmem:[%s738 + $0xe38] sm:$0xff]
        %v1195 = vld [vmem:[%s738 + $0xe40] sm:$0xff]
        %v1196 = vld [vmem:[%s738 + $0xe48] sm:$0xff]
        %v1197 = vld [vmem:[%s738 + $0xe50] sm:$0xff]
        %v1198 = vld [vmem:[%s738 + $0xe58] sm:$0xff]
        %v1199 = vld [vmem:[%s738 + $0xe60] sm:$0xff]
        %v1200 = vld [vmem:[%s738 + $0xe68] sm:$0xff]
        %v1201 = vld [vmem:[%s738 + $0xe70] sm:$0xff]
        %v1202 = vld [vmem:[%s738 + $0xe78] sm:$0xff]
        %v1203 = vld [vmem:[%s738 + $0xe80] sm:$0xff]
        %v1204 = vld [vmem:[%s738 + $0xe88] sm:$0xff]
        %v1205 = vld [vmem:[%s738 + $0xe90] sm:$0xff]
        %v1206 = vld [vmem:[%s738 + $0xe98] sm:$0xff]
        %v1207 = vld [vmem:[%s738 + $0xea0] sm:$0xff]
        %v1208 = vld [vmem:[%s738 + $0xea8] sm:$0xff]
        %v1209 = vld [vmem:[%s738 + $0xeb0] sm:$0xff]
        %v1210 = vld [vmem:[%s738 + $0xeb8] sm:$0xff]
        %v1211 = vld [vmem:[%s738 + $0xec0] sm:$0xff]
        %v1212 = vld [vmem:[%s738 + $0xec8] sm:$0xff]
        %v1213 = vld [vmem:[%s738 + $0xed0] sm:$0xff]
        %v1214 = vld [vmem:[%s738 + $0xed8] sm:$0xff]
        %v1215 = vld [vmem:[%s738 + $0xee0] sm:$0xff]
        %v1216 = vld [vmem:[%s738 + $0xee8] sm:$0xff]
        %v1217 = vld [vmem:[%s738 + $0xef0] sm:$0xff]
        %v1218 = vld [vmem:[%s738 + $0xef8] sm:$0xff]
        %v1219 = vld [vmem:[%s738 + $0xf00] sm:$0xff]
        %v1220 = vld [vmem:[%s738 + $0xf08] sm:$0xff]
        %v1221 = vld [vmem:[%s738 + $0xf10] sm:$0xff]
        %v1222 = vld [vmem:[%s738 + $0xf18] sm:$0xff]
        %v1223 = vld [vmem:[%s738 + $0xf20] sm:$0xff]
        %v1224 = vld [vmem:[%s738 + $0xf28] sm:$0xff]
        %v1225 = vld [vmem:[%s738 + $0xf30] sm:$0xff]
        %v1226 = vld [vmem:[%s738 + $0xf38] sm:$0xff]
        %v1227 = vld [vmem:[%s738 + $0xf40] sm:$0xff]
        %v1228 = vld [vmem:[%s738 + $0xf48] sm:$0xff]
        %v1229 = vld [vmem:[%s738 + $0xf50] sm:$0xff]
        %v1230 = vld [vmem:[%s738 + $0xf58] sm:$0xff]
        %v1231 = vld [vmem:[%s738 + $0xf60] sm:$0xff]
        %v1232 = vld [vmem:[%s738 + $0xf68] sm:$0xff]
        %v1233 = vld [vmem:[%s738 + $0xf70] sm:$0xff]
        %v1234 = vld [vmem:[%s738 + $0xf78] sm:$0xff]
        %v1235 = vld [vmem:[%s738 + $0xf80] sm:$0xff]
        %v1236 = vld [vmem:[%s738 + $0xf88] sm:$0xff]
        %v1237 = vld [vmem:[%s738 + $0xf90] sm:$0xff]
        %v1238 = vld [vmem:[%s738 + $0xf98] sm:$0xff]
        %v1239 = vld [vmem:[%s738 + $0xfa0] sm:$0xff]
        %v1240 = vld [vmem:[%s738 + $0xfa8] sm:$0xff]
        %v1241 = vld [vmem:[%s738 + $0xfb0] sm:$0xff]
        %v1242 = vld [vmem:[%s738 + $0xfb8] sm:$0xff]
        %v1243 = vld [vmem:[%s738 + $0xfc0] sm:$0xff]
        %v1244 = vld [vmem:[%s738 + $0xfc8] sm:$0xff]
        %v1245 = vld [vmem:[%s738 + $0xfd0] sm:$0xff]
        %v1246 = vld [vmem:[%s738 + $0xfd8] sm:$0xff]
        %v1247 = vld [vmem:[%s738 + $0xfe0] sm:$0xff]
        %v1248 = vld [vmem:[%s738 + $0xfe8] sm:$0xff]
        %v1249 = vld [vmem:[#allocation2] sm:$0x1]
        %v1250 = vmul.f32 %v228, %v739
        %v1251 = vmul.f32 %v229, %v740
        %v1252 = vmul.f32 %v230, %v741
        %v1253 = vmul.f32 %v231, %v742
        %v1254 = vmul.f32 %v232, %v743
        %v1255 = vmul.f32 %v233, %v744
        %v1256 = vmul.f32 %v234, %v745
        %v1257 = vmul.f32 %v235, %v746
        %v1258 = vmul.f32 %v236, %v747
        %v1259 = vmul.f32 %v237, %v748
        %v1260 = vmul.f32 %v238, %v749
        %v1261 = vmul.f32 %v239, %v750
        %v1262 = vmul.f32 %v240, %v751
        %v1263 = vmul.f32 %v241, %v752
        %v1264 = vmul.f32 %v242, %v753
        %v1265 = vmul.f32 %v243, %v754
        %v1266 = vmul.f32 %v244, %v755
        %v1267 = vmul.f32 %v245, %v756
        %v1268 = vmul.f32 %v246, %v757
        %v1269 = vmul.f32 %v247, %v758
        %v1270 = vmul.f32 %v248, %v759
        %v1271 = vmul.f32 %v249, %v760
        %v1272 = vmul.f32 %v250, %v761
        %v1273 = vmul.f32 %v251, %v762
        %v1274 = vmul.f32 %v252, %v763
        %v1275 = vmul.f32 %v253, %v764
        %v1276 = vmul.f32 %v254, %v765
        %v1277 = vmul.f32 %v255, %v766
        %v1278 = vmul.f32 %v256, %v767
        %v1279 = vmul.f32 %v257, %v768
        %v1280 = vmul.f32 %v258, %v769
        %v1281 = vmul.f32 %v259, %v770
        %v1282 = vmul.f32 %v260, %v771
        %v1283 = vmul.f32 %v261, %v772
        %v1284 = vmul.f32 %v262, %v773
        %v1285 = vmul.f32 %v263, %v774
        %v1286 = vmul.f32 %v264, %v775
        %v1287 = vmul.f32 %v265, %v776
        %v1288 = vmul.f32 %v266, %v777
        %v1289 = vmul.f32 %v267, %v778
        %v1290 = vmul.f32 %v268, %v779
        %v1291 = vmul.f32 %v269, %v780
        %v1292 = vmul.f32 %v270, %v781
        %v1293 = vmul.f32 %v271, %v782
        %v1294 = vmul.f32 %v272, %v783
        %v1295 = vmul.f32 %v273, %v784
        %v1296 = vmul.f32 %v274, %v785
        %v1297 = vmul.f32 %v275, %v786
        %v1298 = vmul.f32 %v276, %v787
        %v1299 = vmul.f32 %v277, %v788
        %v1300 = vmul.f32 %v278, %v789
        %v1301 = vmul.f32 %v279, %v790
        %v1302 = vmul.f32 %v280, %v791
        %v1303 = vmul.f32 %v281, %v792
        %v1304 = vmul.f32 %v282, %v793
        %v1305 = vmul.f32 %v283, %v794
        %v1306 = vmul.f32 %v284, %v795
        %v1307 = vmul.f32 %v285, %v796
        %v1308 = vmul.f32 %v286, %v797
        %v1309 = vmul.f32 %v287, %v798
        %v1310 = vmul.f32 %v288, %v799
        %v1311 = vmul.f32 %v289, %v800
        %v1312 = vmul.f32 %v290, %v801
        %v1313 = vmul.f32 %v291, %v802
        %v1314 = vmul.f32 %v292, %v803
        %v1315 = vmul.f32 %v293, %v804
        %v1316 = vmul.f32 %v294, %v805
        %v1317 = vmul.f32 %v295, %v806
        %v1318 = vmul.f32 %v296, %v807
        %v1319 = vmul.f32 %v297, %v808
        %v1320 = vmul.f32 %v298, %v809
        %v1321 = vmul.f32 %v299, %v810
        %v1322 = vmul.f32 %v300, %v811
        %v1323 = vmul.f32 %v301, %v812
        %v1324 = vmul.f32 %v302, %v813
        %v1325 = vmul.f32 %v303, %v814
        %v1326 = vmul.f32 %v304, %v815
        %v1327 = vmul.f32 %v305, %v816
        %v1328 = vmul.f32 %v306, %v817
        %v1329 = vmul.f32 %v307, %v818
        %v1330 = vmul.f32 %v308, %v819
        %v1331 = vmul.f32 %v309, %v820
        %v1332 = vmul.f32 %v310, %v821
        %v1333 = vmul.f32 %v311, %v822
        %v1334 = vmul.f32 %v312, %v823
        %v1335 = vmul.f32 %v313, %v824
        %v1336 = vmul.f32 %v314, %v825
        %v1337 = vmul.f32 %v315, %v826
        %v1338 = vmul.f32 %v316, %v827
        %v1339 = vmul.f32 %v317, %v828
        %v1340 = vmul.f32 %v318, %v829
        %v1341 = vmul.f32 %v319, %v830
        %v1342 = vmul.f32 %v320, %v831
        %v1343 = vmul.f32 %v321, %v832
        %v1344 = vmul.f32 %v322, %v833
        %v1345 = vmul.f32 %v323, %v834
        %v1346 = vmul.f32 %v324, %v835
        %v1347 = vmul.f32 %v325, %v836
        %v1348 = vmul.f32 %v326, %v837
        %v1349 = vmul.f32 %v327, %v838
        %v1350 = vmul.f32 %v328, %v839
        %v1351 = vmul.f32 %v329, %v840
        %v1352 = vmul.f32 %v330, %v841
        %v1353 = vmul.f32 %v331, %v842
        %v1354 = vmul.f32 %v332, %v843
        %v1355 = vmul.f32 %v333, %v844
        %v1356 = vmul.f32 %v334, %v845
        %v1357 = vmul.f32 %v335, %v846
        %v1358 = vmul.f32 %v336, %v847
        %v1359 = vmul.f32 %v337, %v848
        %v1360 = vmul.f32 %v338, %v849
        %v1361 = vmul.f32 %v339, %v850
        %v1362 = vmul.f32 %v340, %v851
        %v1363 = vmul.f32 %v341, %v852
        %v1364 = vmul.f32 %v342, %v853
        %v1365 = vmul.f32 %v343, %v854
        %v1366 = vmul.f32 %v344, %v855
        %v1367 = vmul.f32 %v345, %v856
        %v1368 = vmul.f32 %v346, %v857
        %v1369 = vmul.f32 %v347, %v858
        %v1370 = vmul.f32 %v348, %v859
        %v1371 = vmul.f32 %v349, %v860
        %v1372 = vmul.f32 %v350, %v861
        %v1373 = vmul.f32 %v351, %v862
        %v1374 = vmul.f32 %v352, %v863
        %v1375 = vmul.f32 %v353, %v864
        %v1376 = vmul.f32 %v354, %v865
        %v1377 = vmul.f32 %v355, %v866
        %v1378 = vmul.f32 %v356, %v867
        %v1379 = vmul.f32 %v357, %v868
        %v1380 = vmul.f32 %v358, %v869
        %v1381 = vmul.f32 %v359, %v870
        %v1382 = vmul.f32 %v360, %v871
        %v1383 = vmul.f32 %v361, %v872
        %v1384 = vmul.f32 %v362, %v873
        %v1385 = vmul.f32 %v363, %v874
        %v1386 = vmul.f32 %v364, %v875
        %v1387 = vmul.f32 %v365, %v876
        %v1388 = vmul.f32 %v366, %v877
        %v1389 = vmul.f32 %v367, %v878
        %v1390 = vmul.f32 %v368, %v879
        %v1391 = vmul.f32 %v369, %v880
        %v1392 = vmul.f32 %v370, %v881
        %v1393 = vmul.f32 %v371, %v882
        %v1394 = vmul.f32 %v372, %v883
        %v1395 = vmul.f32 %v373, %v884
        %v1396 = vmul.f32 %v374, %v885
        %v1397 = vmul.f32 %v375, %v886
        %v1398 = vmul.f32 %v376, %v887
        %v1399 = vmul.f32 %v377, %v888
        %v1400 = vmul.f32 %v378, %v889
        %v1401 = vmul.f32 %v379, %v890
        %v1402 = vmul.f32 %v380, %v891
        %v1403 = vmul.f32 %v381, %v892
        %v1404 = vmul.f32 %v382, %v893
        %v1405 = vmul.f32 %v383, %v894
        %v1406 = vmul.f32 %v384, %v895
        %v1407 = vmul.f32 %v385, %v896
        %v1408 = vmul.f32 %v386, %v897
        %v1409 = vmul.f32 %v387, %v898
        %v1410 = vmul.f32 %v388, %v899
        %v1411 = vmul.f32 %v389, %v900
        %v1412 = vmul.f32 %v390, %v901
        %v1413 = vmul.f32 %v391, %v902
        %v1414 = vmul.f32 %v392, %v903
        %v1415 = vmul.f32 %v393, %v904
        %v1416 = vmul.f32 %v394, %v905
        %v1417 = vmul.f32 %v395, %v906
        %v1418 = vmul.f32 %v396, %v907
        %v1419 = vmul.f32 %v397, %v908
        %v1420 = vmul.f32 %v398, %v909
        %v1421 = vmul.f32 %v399, %v910
        %v1422 = vmul.f32 %v400, %v911
        %v1423 = vmul.f32 %v401, %v912
        %v1424 = vmul.f32 %v402, %v913
        %v1425 = vmul.f32 %v403, %v914
        %v1426 = vmul.f32 %v404, %v915
        %v1427 = vmul.f32 %v405, %v916
        %v1428 = vmul.f32 %v406, %v917
        %v1429 = vmul.f32 %v407, %v918
        %v1430 = vmul.f32 %v408, %v919
        %v1431 = vmul.f32 %v409, %v920
        %v1432 = vmul.f32 %v410, %v921
        %v1433 = vmul.f32 %v411, %v922
        %v1434 = vmul.f32 %v412, %v923
        %v1435 = vmul.f32 %v413, %v924
        %v1436 = vmul.f32 %v414, %v925
        %v1437 = vmul.f32 %v415, %v926
        %v1438 = vmul.f32 %v416, %v927
        %v1439 = vmul.f32 %v417, %v928
        %v1440 = vmul.f32 %v418, %v929
        %v1441 = vmul.f32 %v419, %v930
        %v1442 = vmul.f32 %v420, %v931
        %v1443 = vmul.f32 %v421, %v932
        %v1444 = vmul.f32 %v422, %v933
        %v1445 = vmul.f32 %v423, %v934
        %v1446 = vmul.f32 %v424, %v935
        %v1447 = vmul.f32 %v425, %v936
        %v1448 = vmul.f32 %v426, %v937
        %v1449 = vmul.f32 %v427, %v938
        %v1450 = vmul.f32 %v428, %v939
        %v1451 = vmul.f32 %v429, %v940
        %v1452 = vmul.f32 %v430, %v941
        %v1453 = vmul.f32 %v431, %v942
        %v1454 = vmul.f32 %v432, %v943
        %v1455 = vmul.f32 %v433, %v944
        %v1456 = vmul.f32 %v434, %v945
        %v1457 = vmul.f32 %v435, %v946
        %v1458 = vmul.f32 %v436, %v947
        %v1459 = vmul.f32 %v437, %v948
        %v1460 = vmul.f32 %v438, %v949
        %v1461 = vmul.f32 %v439, %v950
        %v1462 = vmul.f32 %v440, %v951
        %v1463 = vmul.f32 %v441, %v952
        %v1464 = vmul.f32 %v442, %v953
        %v1465 = vmul.f32 %v443, %v954
        %v1466 = vmul.f32 %v444, %v955
        %v1467 = vmul.f32 %v445, %v956
        %v1468 = vmul.f32 %v446, %v957
        %v1469 = vmul.f32 %v447, %v958
        %v1470 = vmul.f32 %v448, %v959
        %v1471 = vmul.f32 %v449, %v960
        %v1472 = vmul.f32 %v450, %v961
        %v1473 = vmul.f32 %v451, %v962
        %v1474 = vmul.f32 %v452, %v963
        %v1475 = vmul.f32 %v453, %v964
        %v1476 = vmul.f32 %v454, %v965
        %v1477 = vmul.f32 %v455, %v966
        %v1478 = vmul.f32 %v456, %v967
        %v1479 = vmul.f32 %v457, %v968
        %v1480 = vmul.f32 %v458, %v969
        %v1481 = vmul.f32 %v459, %v970
        %v1482 = vmul.f32 %v460, %v971
        %v1483 = vmul.f32 %v461, %v972
        %v1484 = vmul.f32 %v462, %v973
        %v1485 = vmul.f32 %v463, %v974
        %v1486 = vmul.f32 %v464, %v975
        %v1487 = vmul.f32 %v465, %v976
        %v1488 = vmul.f32 %v466, %v977
        %v1489 = vmul.f32 %v467, %v978
        %v1490 = vmul.f32 %v468, %v979
        %v1491 = vmul.f32 %v469, %v980
        %v1492 = vmul.f32 %v470, %v981
        %v1493 = vmul.f32 %v471, %v982
        %v1494 = vmul.f32 %v472, %v983
        %v1495 = vmul.f32 %v473, %v984
        %v1496 = vmul.f32 %v474, %v985
        %v1497 = vmul.f32 %v475, %v986
        %v1498 = vmul.f32 %v476, %v987
        %v1499 = vmul.f32 %v477, %v988
        %v1500 = vmul.f32 %v478, %v989
        %v1501 = vmul.f32 %v479, %v990
        %v1502 = vmul.f32 %v480, %v991
        %v1503 = vmul.f32 %v481, %v992
        %v1504 = vmul.f32 %v482, %v993
        %v1505 = vmul.f32 %v483, %v994
        %v1506 = vmul.f32 %v484, %v995
        %v1507 = vmul.f32 %v485, %v996
        %v1508 = vmul.f32 %v486, %v997
        %v1509 = vmul.f32 %v487, %v998
        %v1510 = vmul.f32 %v488, %v999
        %v1511 = vmul.f32 %v489, %v1000
        %v1512 = vmul.f32 %v490, %v1001
        %v1513 = vmul.f32 %v491, %v1002
        %v1514 = vmul.f32 %v492, %v1003
        %v1515 = vmul.f32 %v493, %v1004
        %v1516 = vmul.f32 %v494, %v1005
        %v1517 = vmul.f32 %v495, %v1006
        %v1518 = vmul.f32 %v496, %v1007
        %v1519 = vmul.f32 %v497, %v1008
        %v1520 = vmul.f32 %v498, %v1009
        %v1521 = vmul.f32 %v499, %v1010
        %v1522 = vmul.f32 %v500, %v1011
        %v1523 = vmul.f32 %v501, %v1012
        %v1524 = vmul.f32 %v502, %v1013
        %v1525 = vmul.f32 %v503, %v1014
        %v1526 = vmul.f32 %v504, %v1015
        %v1527 = vmul.f32 %v505, %v1016
        %v1528 = vmul.f32 %v506, %v1017
        %v1529 = vmul.f32 %v507, %v1018
        %v1530 = vmul.f32 %v508, %v1019
        %v1531 = vmul.f32 %v509, %v1020
        %v1532 = vmul.f32 %v510, %v1021
        %v1533 = vmul.f32 %v511, %v1022
        %v1534 = vmul.f32 %v512, %v1023
        %v1535 = vmul.f32 %v513, %v1024
        %v1536 = vmul.f32 %v514, %v1025
        %v1537 = vmul.f32 %v515, %v1026
        %v1538 = vmul.f32 %v516, %v1027
        %v1539 = vmul.f32 %v517, %v1028
        %v1540 = vmul.f32 %v518, %v1029
        %v1541 = vmul.f32 %v519, %v1030
        %v1542 = vmul.f32 %v520, %v1031
        %v1543 = vmul.f32 %v521, %v1032
        %v1544 = vmul.f32 %v522, %v1033
        %v1545 = vmul.f32 %v523, %v1034
        %v1546 = vmul.f32 %v524, %v1035
        %v1547 = vmul.f32 %v525, %v1036
        %v1548 = vmul.f32 %v526, %v1037
        %v1549 = vmul.f32 %v527, %v1038
        %v1550 = vmul.f32 %v528, %v1039
        %v1551 = vmul.f32 %v529, %v1040
        %v1552 = vmul.f32 %v530, %v1041
        %v1553 = vmul.f32 %v531, %v1042
        %v1554 = vmul.f32 %v532, %v1043
        %v1555 = vmul.f32 %v533, %v1044
        %v1556 = vmul.f32 %v534, %v1045
        %v1557 = vmul.f32 %v535, %v1046
        %v1558 = vmul.f32 %v536, %v1047
        %v1559 = vmul.f32 %v537, %v1048
        %v1560 = vmul.f32 %v538, %v1049
        %v1561 = vmul.f32 %v539, %v1050
        %v1562 = vmul.f32 %v540, %v1051
        %v1563 = vmul.f32 %v541, %v1052
        %v1564 = vmul.f32 %v542, %v1053
        %v1565 = vmul.f32 %v543, %v1054
        %v1566 = vmul.f32 %v544, %v1055
        %v1567 = vmul.f32 %v545, %v1056
        %v1568 = vmul.f32 %v546, %v1057
        %v1569 = vmul.f32 %v547, %v1058
        %v1570 = vmul.f32 %v548, %v1059
        %v1571 = vmul.f32 %v549, %v1060
        %v1572 = vmul.f32 %v550, %v1061
        %v1573 = vmul.f32 %v551, %v1062
        %v1574 = vmul.f32 %v552, %v1063
        %v1575 = vmul.f32 %v553, %v1064
        %v1576 = vmul.f32 %v554, %v1065
        %v1577 = vmul.f32 %v555, %v1066
        %v1578 = vmul.f32 %v556, %v1067
        %v1579 = vmul.f32 %v557, %v1068
        %v1580 = vmul.f32 %v558, %v1069
        %v1581 = vmul.f32 %v559, %v1070
        %v1582 = vmul.f32 %v560, %v1071
        %v1583 = vmul.f32 %v561, %v1072
        %v1584 = vmul.f32 %v562, %v1073
        %v1585 = vmul.f32 %v563, %v1074
        %v1586 = vmul.f32 %v564, %v1075
        %v1587 = vmul.f32 %v565, %v1076
        %v1588 = vmul.f32 %v566, %v1077
        %v1589 = vmul.f32 %v567, %v1078
        %v1590 = vmul.f32 %v568, %v1079
        %v1591 = vmul.f32 %v569, %v1080
        %v1592 = vmul.f32 %v570, %v1081
        %v1593 = vmul.f32 %v571, %v1082
        %v1594 = vmul.f32 %v572, %v1083
        %v1595 = vmul.f32 %v573, %v1084
        %v1596 = vmul.f32 %v574, %v1085
        %v1597 = vmul.f32 %v575, %v1086
        %v1598 = vmul.f32 %v576, %v1087
        %v1599 = vmul.f32 %v577, %v1088
        %v1600 = vmul.f32 %v578, %v1089
        %v1601 = vmul.f32 %v579, %v1090
        %v1602 = vmul.f32 %v580, %v1091
        %v1603 = vmul.f32 %v581, %v1092
        %v1604 = vmul.f32 %v582, %v1093
        %v1605 = vmul.f32 %v583, %v1094
        %v1606 = vmul.f32 %v584, %v1095
        %v1607 = vmul.f32 %v585, %v1096
        %v1608 = vmul.f32 %v586, %v1097
        %v1609 = vmul.f32 %v587, %v1098
        %v1610 = vmul.f32 %v588, %v1099
        %v1611 = vmul.f32 %v589, %v1100
        %v1612 = vmul.f32 %v590, %v1101
        %v1613 = vmul.f32 %v591, %v1102
        %v1614 = vmul.f32 %v592, %v1103
        %v1615 = vmul.f32 %v593, %v1104
        %v1616 = vmul.f32 %v594, %v1105
        %v1617 = vmul.f32 %v595, %v1106
        %v1618 = vmul.f32 %v596, %v1107
        %v1619 = vmul.f32 %v597, %v1108
        %v1620 = vmul.f32 %v598, %v1109
        %v1621 = vmul.f32 %v599, %v1110
        %v1622 = vmul.f32 %v600, %v1111
        %v1623 = vmul.f32 %v601, %v1112
        %v1624 = vmul.f32 %v602, %v1113
        %v1625 = vmul.f32 %v603, %v1114
        %v1626 = vmul.f32 %v604, %v1115
        %v1627 = vmul.f32 %v605, %v1116
        %v1628 = vmul.f32 %v606, %v1117
        %v1629 = vmul.f32 %v607, %v1118
        %v1630 = vmul.f32 %v608, %v1119
        %v1631 = vmul.f32 %v609, %v1120
        %v1632 = vmul.f32 %v610, %v1121
        %v1633 = vmul.f32 %v611, %v1122
        %v1634 = vmul.f32 %v612, %v1123
        %v1635 = vmul.f32 %v613, %v1124
        %v1636 = vmul.f32 %v614, %v1125
        %v1637 = vmul.f32 %v615, %v1126
        %v1638 = vmul.f32 %v616, %v1127
        %v1639 = vmul.f32 %v617, %v1128
        %v1640 = vmul.f32 %v618, %v1129
        %v1641 = vmul.f32 %v619, %v1130
        %v1642 = vmul.f32 %v620, %v1131
        %v1643 = vmul.f32 %v621, %v1132
        %v1644 = vmul.f32 %v622, %v1133
        %v1645 = vmul.f32 %v623, %v1134
        %v1646 = vmul.f32 %v624, %v1135
        %v1647 = vmul.f32 %v625, %v1136
        %v1648 = vmul.f32 %v626, %v1137
        %v1649 = vmul.f32 %v627, %v1138
        %v1650 = vmul.f32 %v628, %v1139
        %v1651 = vmul.f32 %v629, %v1140
        %v1652 = vmul.f32 %v630, %v1141
        %v1653 = vmul.f32 %v631, %v1142
        %v1654 = vmul.f32 %v632, %v1143
        %v1655 = vmul.f32 %v633, %v1144
        %v1656 = vmul.f32 %v634, %v1145
        %v1657 = vmul.f32 %v635, %v1146
        %v1658 = vmul.f32 %v636, %v1147
        %v1659 = vmul.f32 %v637, %v1148
        %v1660 = vmul.f32 %v638, %v1149
        %v1661 = vmul.f32 %v639, %v1150
        %v1662 = vmul.f32 %v640, %v1151
        %v1663 = vmul.f32 %v641, %v1152
        %v1664 = vmul.f32 %v642, %v1153
        %v1665 = vmul.f32 %v643, %v1154
        %v1666 = vmul.f32 %v644, %v1155
        %v1667 = vmul.f32 %v645, %v1156
        %v1668 = vmul.f32 %v646, %v1157
        %v1669 = vmul.f32 %v647, %v1158
        %v1670 = vmul.f32 %v648, %v1159
        %v1671 = vmul.f32 %v649, %v1160
        %v1672 = vmul.f32 %v650, %v1161
        %v1673 = vmul.f32 %v651, %v1162
        %v1674 = vmul.f32 %v652, %v1163
        %v1675 = vmul.f32 %v653, %v1164
        %v1676 = vmul.f32 %v654, %v1165
        %v1677 = vmul.f32 %v655, %v1166
        %v1678 = vmul.f32 %v656, %v1167
        %v1679 = vmul.f32 %v657, %v1168
        %v1680 = vmul.f32 %v658, %v1169
        %v1681 = vmul.f32 %v659, %v1170
        %v1682 = vmul.f32 %v660, %v1171
        %v1683 = vmul.f32 %v661, %v1172
        %v1684 = vmul.f32 %v662, %v1173
        %v1685 = vmul.f32 %v663, %v1174
        %v1686 = vmul.f32 %v664, %v1175
        %v1687 = vmul.f32 %v665, %v1176
        %v1688 = vmul.f32 %v666, %v1177
        %v1689 = vmul.f32 %v667, %v1178
        %v1690 = vmul.f32 %v668, %v1179
        %v1691 = vmul.f32 %v669, %v1180
        %v1692 = vmul.f32 %v670, %v1181
        %v1693 = vmul.f32 %v671, %v1182
        %v1694 = vmul.f32 %v672, %v1183
        %v1695 = vmul.f32 %v673, %v1184
        %v1696 = vmul.f32 %v674, %v1185
        %v1697 = vmul.f32 %v675, %v1186
        %v1698 = vmul.f32 %v676, %v1187
        %v1699 = vmul.f32 %v677, %v1188
        %v1700 = vmul.f32 %v678, %v1189
        %v1701 = vmul.f32 %v679, %v1190
        %v1702 = vmul.f32 %v680, %v1191
        %v1703 = vmul.f32 %v681, %v1192
        %v1704 = vmul.f32 %v682, %v1193
        %v1705 = vmul.f32 %v683, %v1194
        %v1706 = vmul.f32 %v684, %v1195
        %v1707 = vmul.f32 %v685, %v1196
        %v1708 = vmul.f32 %v686, %v1197
        %v1709 = vmul.f32 %v687, %v1198
        %v1710 = vmul.f32 %v688, %v1199
        %v1711 = vmul.f32 %v689, %v1200
        %v1712 = vmul.f32 %v690, %v1201
        %v1713 = vmul.f32 %v691, %v1202
        %v1714 = vmul.f32 %v692, %v1203
        %v1715 = vmul.f32 %v693, %v1204
        %v1716 = vmul.f32 %v694, %v1205
        %v1717 = vmul.f32 %v695, %v1206
        %v1718 = vmul.f32 %v696, %v1207
        %v1719 = vmul.f32 %v697, %v1208
        %v1720 = vmul.f32 %v698, %v1209
        %v1721 = vmul.f32 %v699, %v1210
        %v1722 = vmul.f32 %v700, %v1211
        %v1723 = vmul.f32 %v701, %v1212
        %v1724 = vmul.f32 %v702, %v1213
        %v1725 = vmul.f32 %v703, %v1214
        %v1726 = vmul.f32 %v704, %v1215
        %v1727 = vmul.f32 %v705, %v1216
        %v1728 = vmul.f32 %v706, %v1217
        %v1729 = vmul.f32 %v707, %v1218
        %v1730 = vmul.f32 %v708, %v1219
        %v1731 = vmul.f32 %v709, %v1220
        %v1732 = vmul.f32 %v710, %v1221
        %v1733 = vmul.f32 %v711, %v1222
        %v1734 = vmul.f32 %v712, %v1223
        %v1735 = vmul.f32 %v713, %v1224
        %v1736 = vmul.f32 %v714, %v1225
        %v1737 = vmul.f32 %v715, %v1226
        %v1738 = vmul.f32 %v716, %v1227
        %v1739 = vmul.f32 %v717, %v1228
        %v1740 = vmul.f32 %v718, %v1229
        %v1741 = vmul.f32 %v719, %v1230
        %v1742 = vmul.f32 %v720, %v1231
        %v1743 = vmul.f32 %v721, %v1232
        %v1744 = vmul.f32 %v722, %v1233
        %v1745 = vmul.f32 %v723, %v1234
        %v1746 = vmul.f32 %v724, %v1235
        %v1747 = vmul.f32 %v725, %v1236
        %v1748 = vmul.f32 %v726, %v1237
        %v1749 = vmul.f32 %v727, %v1238
        %v1750 = vmul.f32 %v728, %v1239
        %v1751 = vmul.f32 %v729, %v1240
        %v1752 = vmul.f32 %v730, %v1241
        %v1753 = vmul.f32 %v731, %v1242
        %v1754 = vmul.f32 %v732, %v1243
        %v1755 = vmul.f32 %v733, %v1244
        %v1756 = vmul.f32 %v734, %v1245
        %v1757 = vmul.f32 %v735, %v1246
        %v1758 = vmul.f32 %v736, %v1247
        %v1759 = vmul.f32 %v737, %v1248
        %v1760 = vadd.f32 %v1250, %v1251
        %v1761 = vadd.f32 %v1760, %v1252
        %v1762 = vadd.f32 %v1761, %v1253
        %v1763 = vadd.f32 %v1762, %v1254
        %v1764 = vadd.f32 %v1763, %v1255
        %v1765 = vadd.f32 %v1764, %v1256
        %v1766 = vadd.f32 %v1765, %v1257
        %v1767 = vadd.f32 %v1766, %v1258
        %v1768 = vadd.f32 %v1767, %v1259
        %v1769 = vadd.f32 %v1768, %v1260
        %v1770 = vadd.f32 %v1769, %v1261
        %v1771 = vadd.f32 %v1770, %v1262
        %v1772 = vadd.f32 %v1771, %v1263
        %v1773 = vadd.f32 %v1772, %v1264
        %v1774 = vadd.f32 %v1773, %v1265
        %v1775 = vadd.f32 %v1774, %v1266
        %v1776 = vadd.f32 %v1775, %v1267
        %v1777 = vadd.f32 %v1776, %v1268
        %v1778 = vadd.f32 %v1777, %v1269
        %v1779 = vadd.f32 %v1778, %v1270
        %v1780 = vadd.f32 %v1779, %v1271
        %v1781 = vadd.f32 %v1780, %v1272
        %v1782 = vadd.f32 %v1781, %v1273
        %v1783 = vadd.f32 %v1782, %v1274
        %v1784 = vadd.f32 %v1783, %v1275
        %v1785 = vadd.f32 %v1784, %v1276
        %v1786 = vadd.f32 %v1785, %v1277
        %v1787 = vadd.f32 %v1786, %v1278
        %v1788 = vadd.f32 %v1787, %v1279
        %v1789 = vadd.f32 %v1788, %v1280
        %v1790 = vadd.f32 %v1789, %v1281
        %v1791 = vadd.f32 %v1790, %v1282
        %v1792 = vadd.f32 %v1791, %v1283
        %v1793 = vadd.f32 %v1792, %v1284
        %v1794 = vadd.f32 %v1793, %v1285
        %v1795 = vadd.f32 %v1794, %v1286
        %v1796 = vadd.f32 %v1795, %v1287
        %v1797 = vadd.f32 %v1796, %v1288
        %v1798 = vadd.f32 %v1797, %v1289
        %v1799 = vadd.f32 %v1798, %v1290
        %v1800 = vadd.f32 %v1799, %v1291
        %v1801 = vadd.f32 %v1800, %v1292
        %v1802 = vadd.f32 %v1801, %v1293
        %v1803 = vadd.f32 %v1802, %v1294
        %v1804 = vadd.f32 %v1803, %v1295
        %v1805 = vadd.f32 %v1804, %v1296
        %v1806 = vadd.f32 %v1805, %v1297
        %v1807 = vadd.f32 %v1806, %v1298
        %v1808 = vadd.f32 %v1807, %v1299
        %v1809 = vadd.f32 %v1808, %v1300
        %v1810 = vadd.f32 %v1809, %v1301
        %v1811 = vadd.f32 %v1810, %v1302
        %v1812 = vadd.f32 %v1811, %v1303
        %v1813 = vadd.f32 %v1812, %v1304
        %v1814 = vadd.f32 %v1813, %v1305
        %v1815 = vadd.f32 %v1814, %v1306
        %v1816 = vadd.f32 %v1815, %v1307
        %v1817 = vadd.f32 %v1816, %v1308
        %v1818 = vadd.f32 %v1817, %v1309
        %v1819 = vadd.f32 %v1818, %v1310
        %v1820 = vadd.f32 %v1819, %v1311
        %v1821 = vadd.f32 %v1820, %v1312
        %v1822 = vadd.f32 %v1821, %v1313
        %v1823 = vadd.f32 %v1822, %v1314
        %v1824 = vadd.f32 %v1823, %v1315
        %v1825 = vadd.f32 %v1824, %v1316
        %v1826 = vadd.f32 %v1825, %v1317
        %v1827 = vadd.f32 %v1826, %v1318
        %v1828 = vadd.f32 %v1827, %v1319
        %v1829 = vadd.f32 %v1828, %v1320
        %v1830 = vadd.f32 %v1829, %v1321
        %v1831 = vadd.f32 %v1830, %v1322
        %v1832 = vadd.f32 %v1831, %v1323
        %v1833 = vadd.f32 %v1832, %v1324
        %v1834 = vadd.f32 %v1833, %v1325
        %v1835 = vadd.f32 %v1834, %v1326
        %v1836 = vadd.f32 %v1835, %v1327
        %v1837 = vadd.f32 %v1836, %v1328
        %v1838 = vadd.f32 %v1837, %v1329
        %v1839 = vadd.f32 %v1838, %v1330
        %v1840 = vadd.f32 %v1839, %v1331
        %v1841 = vadd.f32 %v1840, %v1332
        %v1842 = vadd.f32 %v1841, %v1333
        %v1843 = vadd.f32 %v1842, %v1334
        %v1844 = vadd.f32 %v1843, %v1335
        %v1845 = vadd.f32 %v1844, %v1336
        %v1846 = vadd.f32 %v1845, %v1337
        %v1847 = vadd.f32 %v1846, %v1338
        %v1848 = vadd.f32 %v1847, %v1339
        %v1849 = vadd.f32 %v1848, %v1340
        %v1850 = vadd.f32 %v1849, %v1341
        %v1851 = vadd.f32 %v1850, %v1342
        %v1852 = vadd.f32 %v1851, %v1343
        %v1853 = vadd.f32 %v1852, %v1344
        %v1854 = vadd.f32 %v1853, %v1345
        %v1855 = vadd.f32 %v1854, %v1346
        %v1856 = vadd.f32 %v1855, %v1347
        %v1857 = vadd.f32 %v1856, %v1348
        %v1858 = vadd.f32 %v1857, %v1349
        %v1859 = vadd.f32 %v1858, %v1350
        %v1860 = vadd.f32 %v1859, %v1351
        %v1861 = vadd.f32 %v1860, %v1352
        %v1862 = vadd.f32 %v1861, %v1353
        %v1863 = vadd.f32 %v1862, %v1354
        %v1864 = vadd.f32 %v1863, %v1355
        %v1865 = vadd.f32 %v1864, %v1356
        %v1866 = vadd.f32 %v1865, %v1357
        %v1867 = vadd.f32 %v1866, %v1358
        %v1868 = vadd.f32 %v1867, %v1359
        %v1869 = vadd.f32 %v1868, %v1360
        %v1870 = vadd.f32 %v1869, %v1361
        %v1871 = vadd.f32 %v1870, %v1362
        %v1872 = vadd.f32 %v1871, %v1363
        %v1873 = vadd.f32 %v1872, %v1364
        %v1874 = vadd.f32 %v1873, %v1365
        %v1875 = vadd.f32 %v1874, %v1366
        %v1876 = vadd.f32 %v1875, %v1367
        %v1877 = vadd.f32 %v1876, %v1368
        %v1878 = vadd.f32 %v1877, %v1369
        %v1879 = vadd.f32 %v1878, %v1370
        %v1880 = vadd.f32 %v1879, %v1371
        %v1881 = vadd.f32 %v1880, %v1372
        %v1882 = vadd.f32 %v1881, %v1373
        %v1883 = vadd.f32 %v1882, %v1374
        %v1884 = vadd.f32 %v1883, %v1375
        %v1885 = vadd.f32 %v1884, %v1376
        %v1886 = vadd.f32 %v1885, %v1377
        %v1887 = vadd.f32 %v1886, %v1378
        %v1888 = vadd.f32 %v1887, %v1379
        %v1889 = vadd.f32 %v1888, %v1380
        %v1890 = vadd.f32 %v1889, %v1381
        %v1891 = vadd.f32 %v1890, %v1382
        %v1892 = vadd.f32 %v1891, %v1383
        %v1893 = vadd.f32 %v1892, %v1384
        %v1894 = vadd.f32 %v1893, %v1385
        %v1895 = vadd.f32 %v1894, %v1386
        %v1896 = vadd.f32 %v1895, %v1387
        %v1897 = vadd.f32 %v1896, %v1388
        %v1898 = vadd.f32 %v1897, %v1389
        %v1899 = vadd.f32 %v1898, %v1390
        %v1900 = vadd.f32 %v1899, %v1391
        %v1901 = vadd.f32 %v1900, %v1392
        %v1902 = vadd.f32 %v1901, %v1393
        %v1903 = vadd.f32 %v1902, %v1394
        %v1904 = vadd.f32 %v1903, %v1395
        %v1905 = vadd.f32 %v1904, %v1396
        %v1906 = vadd.f32 %v1905, %v1397
        %v1907 = vadd.f32 %v1906, %v1398
        %v1908 = vadd.f32 %v1907, %v1399
        %v1909 = vadd.f32 %v1908, %v1400
        %v1910 = vadd.f32 %v1909, %v1401
        %v1911 = vadd.f32 %v1910, %v1402
        %v1912 = vadd.f32 %v1911, %v1403
        %v1913 = vadd.f32 %v1912, %v1404
        %v1914 = vadd.f32 %v1913, %v1405
        %v1915 = vadd.f32 %v1914, %v1406
        %v1916 = vadd.f32 %v1915, %v1407
        %v1917 = vadd.f32 %v1916, %v1408
        %v1918 = vadd.f32 %v1917, %v1409
        %v1919 = vadd.f32 %v1918, %v1410
        %v1920 = vadd.f32 %v1919, %v1411
        %v1921 = vadd.f32 %v1920, %v1412
        %v1922 = vadd.f32 %v1921, %v1413
        %v1923 = vadd.f32 %v1922, %v1414
        %v1924 = vadd.f32 %v1923, %v1415
        %v1925 = vadd.f32 %v1924, %v1416
        %v1926 = vadd.f32 %v1925, %v1417
        %v1927 = vadd.f32 %v1926, %v1418
        %v1928 = vadd.f32 %v1927, %v1419
        %v1929 = vadd.f32 %v1928, %v1420
        %v1930 = vadd.f32 %v1929, %v1421
        %v1931 = vadd.f32 %v1930, %v1422
        %v1932 = vadd.f32 %v1931, %v1423
        %v1933 = vadd.f32 %v1932, %v1424
        %v1934 = vadd.f32 %v1933, %v1425
        %v1935 = vadd.f32 %v1934, %v1426
        %v1936 = vadd.f32 %v1935, %v1427
        %v1937 = vadd.f32 %v1936, %v1428
        %v1938 = vadd.f32 %v1937, %v1429
        %v1939 = vadd.f32 %v1938, %v1430
        %v1940 = vadd.f32 %v1939, %v1431
        %v1941 = vadd.f32 %v1940, %v1432
        %v1942 = vadd.f32 %v1941, %v1433
        %v1943 = vadd.f32 %v1942, %v1434
        %v1944 = vadd.f32 %v1943, %v1435
        %v1945 = vadd.f32 %v1944, %v1436
        %v1946 = vadd.f32 %v1945, %v1437
        %v1947 = vadd.f32 %v1946, %v1438
        %v1948 = vadd.f32 %v1947, %v1439
        %v1949 = vadd.f32 %v1948, %v1440
        %v1950 = vadd.f32 %v1949, %v1441
        %v1951 = vadd.f32 %v1950, %v1442
        %v1952 = vadd.f32 %v1951, %v1443
        %v1953 = vadd.f32 %v1952, %v1444
        %v1954 = vadd.f32 %v1953, %v1445
        %v1955 = vadd.f32 %v1954, %v1446
        %v1956 = vadd.f32 %v1955, %v1447
        %v1957 = vadd.f32 %v1956, %v1448
        %v1958 = vadd.f32 %v1957, %v1449
        %v1959 = vadd.f32 %v1958, %v1450
        %v1960 = vadd.f32 %v1959, %v1451
        %v1961 = vadd.f32 %v1960, %v1452
        %v1962 = vadd.f32 %v1961, %v1453
        %v1963 = vadd.f32 %v1962, %v1454
        %v1964 = vadd.f32 %v1963, %v1455
        %v1965 = vadd.f32 %v1964, %v1456
        %v1966 = vadd.f32 %v1965, %v1457
        %v1967 = vadd.f32 %v1966, %v1458
        %v1968 = vadd.f32 %v1967, %v1459
        %v1969 = vadd.f32 %v1968, %v1460
        %v1970 = vadd.f32 %v1969, %v1461
        %v1971 = vadd.f32 %v1970, %v1462
        %v1972 = vadd.f32 %v1971, %v1463
        %v1973 = vadd.f32 %v1972, %v1464
        %v1974 = vadd.f32 %v1973, %v1465
        %v1975 = vadd.f32 %v1974, %v1466
        %v1976 = vadd.f32 %v1975, %v1467
        %v1977 = vadd.f32 %v1976, %v1468
        %v1978 = vadd.f32 %v1977, %v1469
        %v1979 = vadd.f32 %v1978, %v1470
        %v1980 = vadd.f32 %v1979, %v1471
        %v1981 = vadd.f32 %v1980, %v1472
        %v1982 = vadd.f32 %v1981, %v1473
        %v1983 = vadd.f32 %v1982, %v1474
        %v1984 = vadd.f32 %v1983, %v1475
        %v1985 = vadd.f32 %v1984, %v1476
        %v1986 = vadd.f32 %v1985, %v1477
        %v1987 = vadd.f32 %v1986, %v1478
        %v1988 = vadd.f32 %v1987, %v1479
        %v1989 = vadd.f32 %v1988, %v1480
        %v1990 = vadd.f32 %v1989, %v1481
        %v1991 = vadd.f32 %v1990, %v1482
        %v1992 = vadd.f32 %v1991, %v1483
        %v1993 = vadd.f32 %v1992, %v1484
        %v1994 = vadd.f32 %v1993, %v1485
        %v1995 = vadd.f32 %v1994, %v1486
        %v1996 = vadd.f32 %v1995, %v1487
        %v1997 = vadd.f32 %v1996, %v1488
        %v1998 = vadd.f32 %v1997, %v1489
        %v1999 = vadd.f32 %v1998, %v1490
        %v2000 = vadd.f32 %v1999, %v1491
        %v2001 = vadd.f32 %v2000, %v1492
        %v2002 = vadd.f32 %v2001, %v1493
        %v2003 = vadd.f32 %v2002, %v1494
        %v2004 = vadd.f32 %v2003, %v1495
        %v2005 = vadd.f32 %v2004, %v1496
        %v2006 = vadd.f32 %v2005, %v1497
        %v2007 = vadd.f32 %v2006, %v1498
        %v2008 = vadd.f32 %v2007, %v1499
        %v2009 = vadd.f32 %v2008, %v1500
        %v2010 = vadd.f32 %v2009, %v1501
        %v2011 = vadd.f32 %v2010, %v1502
        %v2012 = vadd.f32 %v2011, %v1503
        %v2013 = vadd.f32 %v2012, %v1504
        %v2014 = vadd.f32 %v2013, %v1505
        %v2015 = vadd.f32 %v2014, %v1506
        %v2016 = vadd.f32 %v2015, %v1507
        %v2017 = vadd.f32 %v2016, %v1508
        %v2018 = vadd.f32 %v2017, %v1509
        %v2019 = vadd.f32 %v2018, %v1510
        %v2020 = vadd.f32 %v2019, %v1511
        %v2021 = vadd.f32 %v2020, %v1512
        %v2022 = vadd.f32 %v2021, %v1513
        %v2023 = vadd.f32 %v2022, %v1514
        %v2024 = vadd.f32 %v2023, %v1515
        %v2025 = vadd.f32 %v2024, %v1516
        %v2026 = vadd.f32 %v2025, %v1517
        %v2027 = vadd.f32 %v2026, %v1518
        %v2028 = vadd.f32 %v2027, %v1519
        %v2029 = vadd.f32 %v2028, %v1520
        %v2030 = vadd.f32 %v2029, %v1521
        %v2031 = vadd.f32 %v2030, %v1522
        %v2032 = vadd.f32 %v2031, %v1523
        %v2033 = vadd.f32 %v2032, %v1524
        %v2034 = vadd.f32 %v2033, %v1525
        %v2035 = vadd.f32 %v2034, %v1526
        %v2036 = vadd.f32 %v2035, %v1527
        %v2037 = vadd.f32 %v2036, %v1528
        %v2038 = vadd.f32 %v2037, %v1529
        %v2039 = vadd.f32 %v2038, %v1530
        %v2040 = vadd.f32 %v2039, %v1531
        %v2041 = vadd.f32 %v2040, %v1532
        %v2042 = vadd.f32 %v2041, %v1533
        %v2043 = vadd.f32 %v2042, %v1534
        %v2044 = vadd.f32 %v2043, %v1535
        %v2045 = vadd.f32 %v2044, %v1536
        %v2046 = vadd.f32 %v2045, %v1537
        %v2047 = vadd.f32 %v2046, %v1538
        %v2048 = vadd.f32 %v2047, %v1539
        %v2049 = vadd.f32 %v2048, %v1540
        %v2050 = vadd.f32 %v2049, %v1541
        %v2051 = vadd.f32 %v2050, %v1542
        %v2052 = vadd.f32 %v2051, %v1543
        %v2053 = vadd.f32 %v2052, %v1544
        %v2054 = vadd.f32 %v2053, %v1545
        %v2055 = vadd.f32 %v2054, %v1546
        %v2056 = vadd.f32 %v2055, %v1547
        %v2057 = vadd.f32 %v2056, %v1548
        %v2058 = vadd.f32 %v2057, %v1549
        %v2059 = vadd.f32 %v2058, %v1550
        %v2060 = vadd.f32 %v2059, %v1551
        %v2061 = vadd.f32 %v2060, %v1552
        %v2062 = vadd.f32 %v2061, %v1553
        %v2063 = vadd.f32 %v2062, %v1554
        %v2064 = vadd.f32 %v2063, %v1555
        %v2065 = vadd.f32 %v2064, %v1556
        %v2066 = vadd.f32 %v2065, %v1557
        %v2067 = vadd.f32 %v2066, %v1558
        %v2068 = vadd.f32 %v2067, %v1559
        %v2069 = vadd.f32 %v2068, %v1560
        %v2070 = vadd.f32 %v2069, %v1561
        %v2071 = vadd.f32 %v2070, %v1562
        %v2072 = vadd.f32 %v2071, %v1563
        %v2073 = vadd.f32 %v2072, %v1564
        %v2074 = vadd.f32 %v2073, %v1565
        %v2075 = vadd.f32 %v2074, %v1566
        %v2076 = vadd.f32 %v2075, %v1567
        %v2077 = vadd.f32 %v2076, %v1568
        %v2078 = vadd.f32 %v2077, %v1569
        %v2079 = vadd.f32 %v2078, %v1570
        %v2080 = vadd.f32 %v2079, %v1571
        %v2081 = vadd.f32 %v2080, %v1572
        %v2082 = vadd.f32 %v2081, %v1573
        %v2083 = vadd.f32 %v2082, %v1574
        %v2084 = vadd.f32 %v2083, %v1575
        %v2085 = vadd.f32 %v2084, %v1576
        %v2086 = vadd.f32 %v2085, %v1577
        %v2087 = vadd.f32 %v2086, %v1578
        %v2088 = vadd.f32 %v2087, %v1579
        %v2089 = vadd.f32 %v2088, %v1580
        %v2090 = vadd.f32 %v2089, %v1581
        %v2091 = vadd.f32 %v2090, %v1582
        %v2092 = vadd.f32 %v2091, %v1583
        %v2093 = vadd.f32 %v2092, %v1584
        %v2094 = vadd.f32 %v2093, %v1585
        %v2095 = vadd.f32 %v2094, %v1586
        %v2096 = vadd.f32 %v2095, %v1587
        %v2097 = vadd.f32 %v2096, %v1588
        %v2098 = vadd.f32 %v2097, %v1589
        %v2099 = vadd.f32 %v2098, %v1590
        %v2100 = vadd.f32 %v2099, %v1591
        %v2101 = vadd.f32 %v2100, %v1592
        %v2102 = vadd.f32 %v2101, %v1593
        %v2103 = vadd.f32 %v2102, %v1594
        %v2104 = vadd.f32 %v2103, %v1595
        %v2105 = vadd.f32 %v2104, %v1596
        %v2106 = vadd.f32 %v2105, %v1597
        %v2107 = vadd.f32 %v2106, %v1598
        %v2108 = vadd.f32 %v2107, %v1599
        %v2109 = vadd.f32 %v2108, %v1600
        %v2110 = vadd.f32 %v2109, %v1601
        %v2111 = vadd.f32 %v2110, %v1602
        %v2112 = vadd.f32 %v2111, %v1603
        %v2113 = vadd.f32 %v2112, %v1604
        %v2114 = vadd.f32 %v2113, %v1605
        %v2115 = vadd.f32 %v2114, %v1606
        %v2116 = vadd.f32 %v2115, %v1607
        %v2117 = vadd.f32 %v2116, %v1608
        %v2118 = vadd.f32 %v2117, %v1609
        %v2119 = vadd.f32 %v2118, %v1610
        %v2120 = vadd.f32 %v2119, %v1611
        %v2121 = vadd.f32 %v2120, %v1612
        %v2122 = vadd.f32 %v2121, %v1613
        %v2123 = vadd.f32 %v2122, %v1614
        %v2124 = vadd.f32 %v2123, %v1615
        %v2125 = vadd.f32 %v2124, %v1616
        %v2126 = vadd.f32 %v2125, %v1617
        %v2127 = vadd.f32 %v2126, %v1618
        %v2128 = vadd.f32 %v2127, %v1619
        %v2129 = vadd.f32 %v2128, %v1620
        %v2130 = vadd.f32 %v2129, %v1621
        %v2131 = vadd.f32 %v2130, %v1622
        %v2132 = vadd.f32 %v2131, %v1623
        %v2133 = vadd.f32 %v2132, %v1624
        %v2134 = vadd.f32 %v2133, %v1625
        %v2135 = vadd.f32 %v2134, %v1626
        %v2136 = vadd.f32 %v2135, %v1627
        %v2137 = vadd.f32 %v2136, %v1628
        %v2138 = vadd.f32 %v2137, %v1629
        %v2139 = vadd.f32 %v2138, %v1630
        %v2140 = vadd.f32 %v2139, %v1631
        %v2141 = vadd.f32 %v2140, %v1632
        %v2142 = vadd.f32 %v2141, %v1633
        %v2143 = vadd.f32 %v2142, %v1634
        %v2144 = vadd.f32 %v2143, %v1635
        %v2145 = vadd.f32 %v2144, %v1636
        %v2146 = vadd.f32 %v2145, %v1637
        %v2147 = vadd.f32 %v2146, %v1638
        %v2148 = vadd.f32 %v2147, %v1639
        %v2149 = vadd.f32 %v2148, %v1640
        %v2150 = vadd.f32 %v2149, %v1641
        %v2151 = vadd.f32 %v2150, %v1642
        %v2152 = vadd.f32 %v2151, %v1643
        %v2153 = vadd.f32 %v2152, %v1644
        %v2154 = vadd.f32 %v2153, %v1645
        %v2155 = vadd.f32 %v2154, %v1646
        %v2156 = vadd.f32 %v2155, %v1647
        %v2157 = vadd.f32 %v2156, %v1648
        %v2158 = vadd.f32 %v2157, %v1649
        %v2159 = vadd.f32 %v2158, %v1650
        %v2160 = vadd.f32 %v2159, %v1651
        %v2161 = vadd.f32 %v2160, %v1652
        %v2162 = vadd.f32 %v2161, %v1653
        %v2163 = vadd.f32 %v2162, %v1654
        %v2164 = vadd.f32 %v2163, %v1655
        %v2165 = vadd.f32 %v2164, %v1656
        %v2166 = vadd.f32 %v2165, %v1657
        %v2167 = vadd.f32 %v2166, %v1658
        %v2168 = vadd.f32 %v2167, %v1659
        %v2169 = vadd.f32 %v2168, %v1660
        %v2170 = vadd.f32 %v2169, %v1661
        %v2171 = vadd.f32 %v2170, %v1662
        %v2172 = vadd.f32 %v2171, %v1663
        %v2173 = vadd.f32 %v2172, %v1664
        %v2174 = vadd.f32 %v2173, %v1665
        %v2175 = vadd.f32 %v2174, %v1666
        %v2176 = vadd.f32 %v2175, %v1667
        %v2177 = vadd.f32 %v2176, %v1668
        %v2178 = vadd.f32 %v2177, %v1669
        %v2179 = vadd.f32 %v2178, %v1670
        %v2180 = vadd.f32 %v2179, %v1671
        %v2181 = vadd.f32 %v2180, %v1672
        %v2182 = vadd.f32 %v2181, %v1673
        %v2183 = vadd.f32 %v2182, %v1674
        %v2184 = vadd.f32 %v2183, %v1675
        %v2185 = vadd.f32 %v2184, %v1676
        %v2186 = vadd.f32 %v2185, %v1677
        %v2187 = vadd.f32 %v2186, %v1678
        %v2188 = vadd.f32 %v2187, %v1679
        %v2189 = vadd.f32 %v2188, %v1680
        %v2190 = vadd.f32 %v2189, %v1681
        %v2191 = vadd.f32 %v2190, %v1682
        %v2192 = vadd.f32 %v2191, %v1683
        %v2193 = vadd.f32 %v2192, %v1684
        %v2194 = vadd.f32 %v2193, %v1685
        %v2195 = vadd.f32 %v2194, %v1686
        %v2196 = vadd.f32 %v2195, %v1687
        %v2197 = vadd.f32 %v2196, %v1688
        %v2198 = vadd.f32 %v2197, %v1689
        %v2199 = vadd.f32 %v2198, %v1690
        %v2200 = vadd.f32 %v2199, %v1691
        %v2201 = vadd.f32 %v2200, %v1692
        %v2202 = vadd.f32 %v2201, %v1693
        %v2203 = vadd.f32 %v2202, %v1694
        %v2204 = vadd.f32 %v2203, %v1695
        %v2205 = vadd.f32 %v2204, %v1696
        %v2206 = vadd.f32 %v2205, %v1697
        %v2207 = vadd.f32 %v2206, %v1698
        %v2208 = vadd.f32 %v2207, %v1699
        %v2209 = vadd.f32 %v2208, %v1700
        %v2210 = vadd.f32 %v2209, %v1701
        %v2211 = vadd.f32 %v2210, %v1702
        %v2212 = vadd.f32 %v2211, %v1703
        %v2213 = vadd.f32 %v2212, %v1704
        %v2214 = vadd.f32 %v2213, %v1705
        %v2215 = vadd.f32 %v2214, %v1706
        %v2216 = vadd.f32 %v2215, %v1707
        %v2217 = vadd.f32 %v2216, %v1708
        %v2218 = vadd.f32 %v2217, %v1709
        %v2219 = vadd.f32 %v2218, %v1710
        %v2220 = vadd.f32 %v2219, %v1711
        %v2221 = vadd.f32 %v2220, %v1712
        %v2222 = vadd.f32 %v2221, %v1713
        %v2223 = vadd.f32 %v2222, %v1714
        %v2224 = vadd.f32 %v2223, %v1715
        %v2225 = vadd.f32 %v2224, %v1716
        %v2226 = vadd.f32 %v2225, %v1717
        %v2227 = vadd.f32 %v2226, %v1718
        %v2228 = vadd.f32 %v2227, %v1719
        %v2229 = vadd.f32 %v2228, %v1720
        %v2230 = vadd.f32 %v2229, %v1721
        %v2231 = vadd.f32 %v2230, %v1722
        %v2232 = vadd.f32 %v2231, %v1723
        %v2233 = vadd.f32 %v2232, %v1724
        %v2234 = vadd.f32 %v2233, %v1725
        %v2235 = vadd.f32 %v2234, %v1726
        %v2236 = vadd.f32 %v2235, %v1727
        %v2237 = vadd.f32 %v2236, %v1728
        %v2238 = vadd.f32 %v2237, %v1729
        %v2239 = vadd.f32 %v2238, %v1730
        %v2240 = vadd.f32 %v2239, %v1731
        %v2241 = vadd.f32 %v2240, %v1732
        %v2242 = vadd.f32 %v2241, %v1733
        %v2243 = vadd.f32 %v2242, %v1734
        %v2244 = vadd.f32 %v2243, %v1735
        %v2245 = vadd.f32 %v2244, %v1736
        %v2246 = vadd.f32 %v2245, %v1737
        %v2247 = vadd.f32 %v2246, %v1738
        %v2248 = vadd.f32 %v2247, %v1739
        %v2249 = vadd.f32 %v2248, %v1740
        %v2250 = vadd.f32 %v2249, %v1741
        %v2251 = vadd.f32 %v2250, %v1742
        %v2252 = vadd.f32 %v2251, %v1743
        %v2253 = vadd.f32 %v2252, %v1744
        %v2254 = vadd.f32 %v2253, %v1745
        %v2255 = vadd.f32 %v2254, %v1746
        %v2256 = vadd.f32 %v2255, %v1747
        %v2257 = vadd.f32 %v2256, %v1748
        %v2258 = vadd.f32 %v2257, %v1749
        %v2259 = vadd.f32 %v2258, %v1750
        %v2260 = vadd.f32 %v2259, %v1751
        %v2261 = vadd.f32 %v2260, %v1752
        %v2262 = vadd.f32 %v2261, %v1753
        %v2263 = vadd.f32 %v2262, %v1754
        %v2264 = vadd.f32 %v2263, %v1755
        %v2265 = vadd.f32 %v2264, %v1756
        %v2266 = vadd.f32 %v2265, %v1757
        %v2267 = vadd.f32 %v2266, %v1758
        %v2268 = vadd.f32 %v2267, %v1759
        %v2269 = vrot.slane %v2268, 4
        %v2270 = vadd.f32 %v2268, %v2269
        %v2271 = vrot.slane %v2270, 2
        %v2272 = vadd.f32 %v2270, %v2271
        %v2273 = vrot.slane %v2272, 1
        %v2274 = vadd.f32 %v2272, %v2273
        %v2275 = vadd.f32 %v1249, %v2274
        %2276 = vst [vmem:[#allocation2] sm:$0x1] %v2275
        %p2277 = scmp.eq.s32.totalorder %s27, 1
        // Predicated region
        $region45: #{tpu_custom_call.1} parent=31 // pred_check
          %p2278 = pneg %p2277
        $region46: #{tpu_custom_call.1} parent=31 // pred_check_branch
          %2280 = sbr.rel (%p2278) target = $region48
        $region47: #{tpu_custom_call.1} parent=31 // pred_region
          %v2281 = vld [vmem:[#allocation2] sm:$0x1]
          %vm2282 = vcmask 1040384
          %v2283 = vsel %vm2282, %v2281, 0.0
          %2284 = vadd.xlane.f32.xlu0 %v2283
          %v2285 = vpop.xlane.xlu0 %2284
          %v2286 = vrot.slane %v2285, 4
          %v2287 = vadd.f32 %v2285, %v2286
          %v2288 = vrot.slane %v2287, 2
          %v2289 = vadd.f32 %v2287, %v2288
          %v2290 = vrot.slane %v2289, 1
          %v2291 = vadd.f32 %v2289, %v2290
          %s2292 = vtos %v2291
          %s2293 = sld [smem:[#allocation3]]
          %s2294 = sadd.f32 %s2292, %s2293
          %s2295 = smax.f32 %s2294, 0.8
          %s2296 = smin.f32 %s2295, 1.9
          %v2297 = vstv %s2296
          %2298 = vst [vmem:[%s220] sm:$0xff] %v2297
        $region48: #{tpu_custom_call.1} parent=31 // pred_fallthru
          _
        %s2299 = sand.u32 %s112, 1
        %s2300 = scalar_lea.sflag [#allocation6], %s2299
        %s2301 = sand.u32 %s112, 1
        %s2302 = smul.addr %s2301, 8
        %s2303 = scalar_lea.vmem [#allocation9], %s2302
        // Predicated region
        $region49: #{tpu_custom_call.1} parent=31 // pred_check
          %p2304 = pneg %p122
        $region50: #{tpu_custom_call.1} parent=31 // pred_check_branch
          %2306 = sbr.rel (%p2304) target = $region52
        $region51: #{tpu_custom_call.1} parent=31 // pred_region
          %s2308 = ssub.s32 128, 128
          %2309 = vsyncadd %s2300, %s2308
          %s2310 = smul.addr %s26, 128
          %s2311 = scalar_lea.hbm %s3, %s2310
          %s2313 = sshll.u32 %s2303, 4
          %s2314 = int_to_ptr.vmem [resolvable:$true] %s2313
          %2316 = dma.vmem_to_hbm [thread:$0]  %s2314, 128, %s2311, %s2300
        $region52: #{tpu_custom_call.1} parent=31 // pred_fallthru
          _
      $region32: #{tpu_custom_call.1} parent=5 // pred_fallthru
        _
      %p2317 = scmp.le.s32.totalorder 2, %s17
      // Predicated region
      $region53: #{tpu_custom_call.1} parent=5 // pred_check
        %p2318 = pneg %p2317
      $region54: #{tpu_custom_call.1} parent=5 // pred_check_branch
        %2320 = sbr.rel (%p2318) target = $region56
      $region55: #{tpu_custom_call.1} parent=5 // pred_region
        %s2321 = ssub.s32 %s17, 2
        // Predicated region
        $region57: #{tpu_custom_call.1} parent=55 // pred_check
          %p2322 = pneg %p128
        $region58: #{tpu_custom_call.1} parent=55 // pred_check_branch
          %2324 = sbr.rel (%p2322) target = $region60
        $region59: #{tpu_custom_call.1} parent=55 // pred_region
          %s2325 = sand.u32 %s113, 1
          %s2326 = scalar_lea.sflag [#allocation6], %s2325
          %s2327 = sand.u32 %s113, 1
          %s2328 = smul.addr %s2327, 8
          %s2329 = scalar_lea.vmem [#allocation9], %s2328
          %2330 = dma.done %s2326, 128
        $region60: #{tpu_custom_call.1} parent=55 // pred_fallthru
          _
      $region56: #{tpu_custom_call.1} parent=5 // pred_fallthru
        _
    $region6: #{tpu_custom_call.1} parent=1 // loop_footer
      %s21 = sadd.s32 1, %s17
    $region7: #{tpu_custom_call.1} parent=1 // loop_footer_branch
      %16 = sbr.rel target = $region3
    $region8: #{tpu_custom_call.1} parent=1 // loop_exit
      _
    %2331 = vsyncpa [#allocation5], 1
    %s2332 = scalar_lea.sflag [#allocation5], 1
    %2333 = vsyncpa %s2332, 1
    %2334 = vsyncpa [#allocation8], 1
    %2335 = vsyncpa [#allocation6], 1
    %s2336 = scalar_lea.sflag [#allocation6], 1
    %2337 = vsyncpa %s2336, 1

</llo_original>
